<compile_context>
chip_gen: v5e
topology: v5e:2x2
jax: 0.10.0
libtpu: 0.0.40
codegen_flags: <defaults>
</compile_context>

<pallas_src>
import jax
import jax.numpy as jnp
from jax.experimental import pallas as pl
from jax.experimental.pallas import tpu as pltpu


def _backbone_kernel(x_ref, w1_ref, b1_ref, w2_ref, b2_ref, o_ref):
    """Fused Linear -> ReLU -> Linear on one (TM, d_in) batch tile.

    Weights/biases have constant index_maps and a single pipeline buffer, so
    they stay VMEM-resident across batch-grid steps; both matmuls run on the
    MXU with f32 accumulation, the bias+ReLU epilogue runs in f32 on the VPU.
    """
    x = x_ref[...]                                                   # bf16
    h = jnp.dot(x, w1_ref[...], preferred_element_type=jnp.float32)  # MXU
    h = jnp.maximum(h + b1_ref[...], 0.0)                            # f32 VPU epilogue
    h = h.astype(w2_ref.dtype)                                       # bf16 operand for 2nd MXU pass
    y = jnp.dot(h, w2_ref[...], preferred_element_type=jnp.float32)  # MXU
    o_ref[...] = (y + b2_ref[...]).astype(o_ref.dtype)


def adapter_wrapper_forward(x, params, *, tm=512):
    """AdapterWrapper.forward(x) == peft.base_model(x) (frozen backbone)."""
    w1, b1, w2, b2 = params["w1"], params["b1"], params["w2"], params["b2"]
    batch, d_in = x.shape
    d_hidden = w1.shape[1]
    d_out = w2.shape[1]

    # Ragged last tile is masked by Pallas: no pad copy in, no slice copy out.
    grid = (pl.cdiv(batch, tm),)

    act_bytes = x.dtype.itemsize
    w_bytes = w1.dtype.itemsize

    cost = pl.CostEstimate(
        flops=2 * batch * (d_in * d_hidden + d_hidden * d_out),
        transcendentals=0,
        bytes_accessed=(batch * d_in * act_bytes
                        + (d_in * d_hidden + d_hidden * d_out) * w_bytes
                        + (d_hidden + d_out) * 4
                        + batch * d_out * act_bytes),
    )

    # VMEM budget: streamed x/out tiles are double-buffered, the invariant
    # weights/biases single-buffered, plus the f32 hidden-activation tile.
    vmem_need = (2 * tm * d_in * act_bytes
                 + 2 * tm * d_out * act_bytes
                 + (d_in * d_hidden + d_hidden * d_out) * w_bytes
                 + (d_hidden + d_out) * 4
                 + tm * d_hidden * 4)
    vmem_limit = min(max(int(1.5 * vmem_need), 32 * 1024 * 1024),
                     48 * 1024 * 1024)

    resident = dict(pipeline_mode=pl.Buffered(1))  # grid-invariant: one buffer

    out = pl.pallas_call(
        _backbone_kernel,
        out_shape=jax.ShapeDtypeStruct((batch, d_out), x.dtype),
        grid=grid,
        in_specs=[
            # Streamed batch tile (default double-buffering; raise to
            # pl.Buffered(3) only if profiling shows exposed input DMA).
            pl.BlockSpec((tm, d_in), lambda i: (i, 0)),
            pl.BlockSpec((d_in, d_hidden), lambda i: (0, 0), **resident),
            pl.BlockSpec((1, d_hidden), lambda i: (0, 0), **resident),
            pl.BlockSpec((d_hidden, d_out), lambda i: (0, 0), **resident),
            pl.BlockSpec((1, d_out), lambda i: (0, 0), **resident),
        ],
        out_specs=pl.BlockSpec((tm, d_out), lambda i: (i, 0)),
        compiler_params=pltpu.CompilerParams(
            dimension_semantics=("parallel",),        # megacore sharding on v7x
            vmem_limit_bytes=vmem_limit),
        cost_estimate=cost,
    )(x, w1, b1, w2, b2)
    return out


def init_backbone_params(key, d_in, d_hidden, d_out, *, param_dtype=jnp.bfloat16):
    """Deterministic synthetic backbone parameters (PyTorch-Linear style init).

    Weights in bf16 (MXU-friendly), biases kept in f32 for the epilogue.
    """
    k1, k2, k3, k4 = jax.random.split(key, 4)
    lim1 = 1.0 / (d_in ** 0.5)
    lim2 = 1.0 / (d_hidden ** 0.5)
    return {
        "w1": jax.random.uniform(k1, (d_in, d_hidden), jnp.float32,
                                 -lim1, lim1).astype(param_dtype),
        "b1": jax.random.uniform(k2, (1, d_hidden), jnp.float32, -lim1, lim1),
        "w2": jax.random.uniform(k3, (d_hidden, d_out), jnp.float32,
                                 -lim2, lim2).astype(param_dtype),
        "b2": jax.random.uniform(k4, (1, d_out), jnp.float32, -lim2, lim2),
    }


def _reference_forward(x, params):
    """Pure-JAX reference with the same dtype path as the kernel."""
    h = jnp.dot(x, params["w1"], preferred_element_type=jnp.float32) + params["b1"]
    h = jnp.maximum(h, 0.0).astype(params["w2"].dtype)
    y = jnp.dot(h, params["w2"], preferred_element_type=jnp.float32) + params["b2"]
    return y.astype(x.dtype)


if __name__ == "__main__":
    key = jax.random.PRNGKey(0)
    k_param, k_x = jax.random.split(key)

    # Small demo shapes: dims are multiples of 256 (fills the 256x256 MXU on
    # v6e/v7x); batch=1000 is deliberately NOT a tile multiple to exercise the
    # copy-free ragged-tile path; tm=256 -> 4 grid steps (2 per v7x core).
    batch, d_in, d_hidden, d_out = 1000, 256, 256, 256
    params = init_backbone_params(k_param, d_in, d_hidden, d_out)
    x = jax.random.normal(k_x, (batch, d_in), dtype=jnp.float32).astype(jnp.bfloat16)

    out = adapter_wrapper_forward(x, params, tm=256)
    out = jax.block_until_ready(out)

    ref = _reference_forward(x, params)
    assert out.shape == (batch, d_out)
    assert jnp.allclose(out.astype(jnp.float32), ref.astype(jnp.float32),
                        atol=2e-2, rtol=2e-2)

    print("KERNEL_OK")
</pallas_src>

<mosaic_0001>
module attributes {stable_mosaic.version = 11 : i64} {
  func.func @_backbone_kernel(%arg0: i32, %arg1: memref<256x256xbf16, #tpu.memory_space<vmem>>, %arg2: memref<256x256xbf16, #tpu.memory_space<vmem>>, %arg3: memref<1x256xf32, #tpu.memory_space<vmem>>, %arg4: memref<256x256xbf16, #tpu.memory_space<vmem>>, %arg5: memref<1x256xf32, #tpu.memory_space<vmem>>, %arg6: memref<256x256xbf16, #tpu.memory_space<vmem>>) attributes {dimension_semantics = [#tpu.dimension_semantics<parallel>], iteration_bounds = array<i64: 4>, scalar_prefetch = 0 : i64, scratch_operands = 0 : i64, tpu.core_type = #tpu.core_type<tc>, window_params = [{transform_indices = @transform_0, window_bounds = array<i64: 256, 256>}, {pipeline_mode = #tpu.pipeline_mode<synchronous>, transform_indices = @transform_1, window_bounds = array<i64: 256, 256>}, {pipeline_mode = #tpu.pipeline_mode<synchronous>, transform_indices = @transform_2, window_bounds = array<i64: 1, 256>}, {pipeline_mode = #tpu.pipeline_mode<synchronous>, transform_indices = @transform_3, window_bounds = array<i64: 256, 256>}, {pipeline_mode = #tpu.pipeline_mode<synchronous>, transform_indices = @transform_4, window_bounds = array<i64: 1, 256>}, {transform_indices = @transform_5, window_bounds = array<i64: 256, 256>}]} {
    %c0 = arith.constant 0 : index
    %c0_0 = arith.constant 0 : index
    %0 = vector.load %arg1[%c0, %c0_0] : memref<256x256xbf16, #tpu.memory_space<vmem>>, vector<256x256xbf16>
    %c0_1 = arith.constant 0 : index
    %c0_2 = arith.constant 0 : index
    %1 = vector.load %arg2[%c0_1, %c0_2] : memref<256x256xbf16, #tpu.memory_space<vmem>>, vector<256x256xbf16>
    %cst = arith.constant dense<0.000000e+00> : vector<256x256xf32>
    %2 = tpu.matmul %0, %1, %cst {dimension_numbers = #tpu.dot_dimension_numbers<[1], [0], [0], [1], [0, 0, 1, 1], [], []>} : vector<256x256xbf16>, vector<256x256xbf16>, vector<256x256xf32> -> vector<256x256xf32>
    %c0_3 = arith.constant 0 : index
    %c0_4 = arith.constant 0 : index
    %3 = vector.load %arg3[%c0_3, %c0_4] : memref<1x256xf32, #tpu.memory_space<vmem>>, vector<1x256xf32>
    %4 = vector.broadcast %3 : vector<1x256xf32> to vector<256x256xf32>
    %5 = arith.addf %2, %4 : vector<256x256xf32>
    %cst_5 = arith.constant 0.000000e+00 : f32
    %6 = vector.broadcast %cst_5 : f32 to vector<256x256xf32>
    %7 = arith.maximumf %5, %6 : vector<256x256xf32>
    %8 = arith.truncf %7 : vector<256x256xf32> to vector<256x256xbf16>
    %c0_6 = arith.constant 0 : index
    %c0_7 = arith.constant 0 : index
    %9 = vector.load %arg4[%c0_6, %c0_7] : memref<256x256xbf16, #tpu.memory_space<vmem>>, vector<256x256xbf16>
    %cst_8 = arith.constant dense<0.000000e+00> : vector<256x256xf32>
    %10 = tpu.matmul %8, %9, %cst_8 {dimension_numbers = #tpu.dot_dimension_numbers<[1], [0], [0], [1], [0, 0, 1, 1], [], []>} : vector<256x256xbf16>, vector<256x256xbf16>, vector<256x256xf32> -> vector<256x256xf32>
    %c0_9 = arith.constant 0 : index
    %c0_10 = arith.constant 0 : index
    %11 = vector.load %arg5[%c0_9, %c0_10] : memref<1x256xf32, #tpu.memory_space<vmem>>, vector<1x256xf32>
    %12 = vector.broadcast %11 : vector<1x256xf32> to vector<256x256xf32>
    %13 = arith.addf %10, %12 : vector<256x256xf32>
    %14 = arith.truncf %13 : vector<256x256xf32> to vector<256x256xbf16>
    %c0_11 = arith.constant 0 : index
    %c0_12 = arith.constant 0 : index
    %15 = vector.load %arg6[%c0_11, %c0_12] : memref<256x256xbf16, #tpu.memory_space<vmem>>, vector<256x256xbf16>
    tpu.vector_store %arg6[%c0_11, %c0_12], %14 {strides = array<i32>} : memref<256x256xbf16, #tpu.memory_space<vmem>>, vector<256x256xbf16>,
    return
  }
  func.func @transform_0(%arg0: i32) -> (i32, i32) {
    %c0_i32 = arith.constant 0 : i32
    %c0_i32_0 = arith.constant 0 : i32
    return %arg0, %c0_i32 : i32, i32
  }
  func.func @transform_1(%arg0: i32) -> (i32, i32) {
    %c0_i32 = arith.constant 0 : i32
    %c0_i32_0 = arith.constant 0 : i32
    %c0_i32_1 = arith.constant 0 : i32
    return %c0_i32, %c0_i32_0 : i32, i32
  }
  func.func @transform_2(%arg0: i32) -> (i32, i32) {
    %c0_i32 = arith.constant 0 : i32
    %c0_i32_0 = arith.constant 0 : i32
    %c0_i32_1 = arith.constant 0 : i32
    return %c0_i32, %c0_i32_0 : i32, i32
  }
  func.func @transform_3(%arg0: i32) -> (i32, i32) {
    %c0_i32 = arith.constant 0 : i32
    %c0_i32_0 = arith.constant 0 : i32
    %c0_i32_1 = arith.constant 0 : i32
    return %c0_i32, %c0_i32_0 : i32, i32
  }
  func.func @transform_4(%arg0: i32) -> (i32, i32) {
    %c0_i32 = arith.constant 0 : i32
    %c0_i32_0 = arith.constant 0 : i32
    %c0_i32_1 = arith.constant 0 : i32
    return %c0_i32, %c0_i32_0 : i32, i32
  }
  func.func @transform_5(%arg0: i32) -> (i32, i32) {
    %c0_i32 = arith.constant 0 : i32
    %c0_i32_0 = arith.constant 0 : i32
    return %arg0, %c0_i32 : i32, i32
  }
}

</mosaic_0001>

<llo_original>
// kernel: tpu_custom_call.1
$region0: #{tpu_custom_call.1}
  #allocation0 [shape = 'u32[]', space=smem, size = 0x4, offset = 0x4, fixed_abs, tag = 'smem constant byte address 0x4 - core index']
  #allocation1 [shape = 'u32[72,128]{1,0:T(1,128)}', space=vmem, size = 0x9000, scoped, tag = 'internal scratch']
  %s0 = inlined_call_operand.hbm [shape: bf16[1000,256], index: 0, kind: input, shape index: {}]
  %s1 = inlined_call_operand.hbm [shape: bf16[256,256], index: 1, kind: input, shape index: {}]
  %s2 = inlined_call_operand.hbm [shape: f32[1,256], index: 2, kind: input, shape index: {}]
  %s3 = inlined_call_operand.hbm [shape: bf16[256,256], index: 3, kind: input, shape index: {}]
  %s4 = inlined_call_operand.vmem [shape: f32[1,256], index: 4, kind: input, shape index: {}]
  %s5 = inlined_call_operand.hbm [shape: bf16[1000,256], index: 5, kind: output, shape index: {}]
  %s6 = sld [smem:[#allocation0]]
  $region69: #{tpu_custom_call.1} parent=0
    _
  %s8 = ssub.s32 1, %s6
  %s9 = scalar_select 0, %s8, %s6
  $region1: #{tpu_custom_call.1} parent=0
    #allocation2 [shape = 'u8[262144]{0}', space=vmem, size = 0x40000, scoped, tag = 'input window, operand 0']
    #allocation3 [shape = 's32[2]{0}', space=sflag, size = 0x8, scoped, tag = 'scoped memory for tpu_custom_call.1']
    #allocation4 [shape = 's32[2]{0}', space=sflag, size = 0x8, scoped, tag = 'scoped memory for tpu_custom_call.1']
    #allocation5 [shape = 'u8[131072]{0}', space=vmem, size = 0x20000, scoped, tag = 'input window, operand 1, single buffered']
    #allocation6 [shape = 's32[1]{0}', space=sflag, size = 0x4, scoped, tag = 'scoped memory for tpu_custom_call.1']
    #allocation7 [shape = 'u8[1024]{0}', space=vmem, size = 0x400, scoped, tag = 'input window, operand 2, single buffered']
    #allocation8 [shape = 'u8[131072]{0}', space=vmem, size = 0x20000, scoped, tag = 'input window, operand 3, single buffered']
    #allocation9 [shape = 's32[1]{0}', space=sflag, size = 0x4, scoped, tag = 'scoped memory for tpu_custom_call.1']
    #allocation10 [shape = 'u8[262144]{0}', space=vmem, size = 0x40000, scoped, tag = 'output window, operand 0']
    %10 = vsyncpa [#allocation3], 0
    %s11 = scalar_lea.sflag [#allocation3], 1
    %12 = vsyncpa %s11, 0
    %13 = vsyncpa [#allocation6], 0
    %14 = vsyncpa [#allocation9], 0
    %15 = vsyncpa [#allocation4], 0
    %s16 = scalar_lea.sflag [#allocation4], 1
    %17 = vsyncpa %s16, 0
    loop: start=0, step=1, limit=6
    $region2: #{tpu_custom_call.1} parent=1 // loop_pre_header
      _
    $region3: #{tpu_custom_call.1} parent=1 // loop_header
      %s19 = sphi 0, %s23
      %p20 = scmp.ge.s32.totalorder %s19, 6
      %s29 = sphi 0, %s31
      %s32 = sphi 0, %s29
      %s33 = sphi 0, %s32
      %s49 = sphi 0, %s33
      %s53 = sphi 0, %s53
      %s55 = sphi 0, %s53
      %s56 = sphi 0, %s55
      %s70 = sphi 0, %s56
      %s74 = sphi 0, %s74
      %s76 = sphi 0, %s74
      %s77 = sphi 0, %s76
      %s91 = sphi 0, %s77
      %s95 = sphi 0, %s95
      %s97 = sphi 0, %s95
      %s98 = sphi 0, %s97
      %s112 = sphi 0, %s98
      %s116 = sphi 0, %s116
      %s118 = sphi 0, %s116
      %s119 = sphi 0, %s118
      %s133 = sphi 0, %s119
      %s139 = sphi 0, %s141
      %s142 = sphi 0, %s139
      %s143 = sphi 0, %s142
      %s159 = sphi 0, %s143
    $region4: #{tpu_custom_call.1} parent=1 // loop_header_branch
      %22 = sbr.rel (%p20) target = $region8
    $region5: #{tpu_custom_call.1} parent=1 // loop_body
      %s24 = ssub.s32 %s19, 1
      %s25 = ssub.s32 %s19, 2
      %s26 = sadd.s32 %s19, 1
      %s27 = ssub.s32 %s19, %s26
      %p28 = scmp.eq.s32.totalorder %s27, 0
      %s30 = sadd.s32 %s29, 1
      %s31 = scalar_select %p28, %s29, %s30
      %p34 = pneg %p28
      %p35 = scmp.eq.s32.totalorder %s19, 3
      %p36 = por %p34, %p35
      %p37 = scmp.ne.s32.totalorder %s29, %s32
      %p38 = scmp.eq.s32.totalorder %s19, 0
      %p39 = por %p37, %p38
      %p40 = scmp.ne.s32.totalorder %s29, %s32
      %p41 = scmp.eq.s32.totalorder %s24, 3
      %p42 = por %p40, %p41
      %p43 = scmp.ne.s32.totalorder %s32, %s33
      %p44 = scmp.eq.s32.totalorder %s24, 0
      %p45 = por %p43, %p44
      %p46 = scmp.ne.s32.totalorder %s32, %s33
      %p47 = scmp.eq.s32.totalorder %s25, 3
      %p48 = por %p46, %p47
      %p50 = scmp.ne.s32.totalorder %s33, %s49
      %p51 = scmp.eq.s32.totalorder %s25, 0
      %p52 = por %p50, %p51
      %s54 = sadd.s32 %s53, 1
      %p57 = scmp.eq.s32.totalorder %s19, 3
      %p58 = scmp.ne.s32.totalorder %s53, %s55
      %p59 = scmp.eq.s32.totalorder %s19, 0
      %p60 = por %p58, %p59
      %p61 = scmp.ne.s32.totalorder %s53, %s55
      %p62 = scmp.eq.s32.totalorder %s24, 3
      %p63 = por %p61, %p62
      %p64 = scmp.ne.s32.totalorder %s55, %s56
      %p65 = scmp.eq.s32.totalorder %s24, 0
      %p66 = por %p64, %p65
      %p67 = scmp.ne.s32.totalorder %s55, %s56
      %p68 = scmp.eq.s32.totalorder %s25, 3
      %p69 = por %p67, %p68
      %p71 = scmp.ne.s32.totalorder %s56, %s70
      %p72 = scmp.eq.s32.totalorder %s25, 0
      %p73 = por %p71, %p72
      %s75 = sadd.s32 %s74, 1
      %p78 = scmp.eq.s32.totalorder %s19, 3
      %p79 = scmp.ne.s32.totalorder %s74, %s76
      %p80 = scmp.eq.s32.totalorder %s19, 0
      %p81 = por %p79, %p80
      %p82 = scmp.ne.s32.totalorder %s74, %s76
      %p83 = scmp.eq.s32.totalorder %s24, 3
      %p84 = por %p82, %p83
      %p85 = scmp.ne.s32.totalorder %s76, %s77
      %p86 = scmp.eq.s32.totalorder %s24, 0
      %p87 = por %p85, %p86
      %p88 = scmp.ne.s32.totalorder %s76, %s77
      %p89 = scmp.eq.s32.totalorder %s25, 3
      %p90 = por %p88, %p89
      %p92 = scmp.ne.s32.totalorder %s77, %s91
      %p93 = scmp.eq.s32.totalorder %s25, 0
      %p94 = por %p92, %p93
      %s96 = sadd.s32 %s95, 1
      %p99 = scmp.eq.s32.totalorder %s19, 3
      %p100 = scmp.ne.s32.totalorder %s95, %s97
      %p101 = scmp.eq.s32.totalorder %s19, 0
      %p102 = por %p100, %p101
      %p103 = scmp.ne.s32.totalorder %s95, %s97
      %p104 = scmp.eq.s32.totalorder %s24, 3
      %p105 = por %p103, %p104
      %p106 = scmp.ne.s32.totalorder %s97, %s98
      %p107 = scmp.eq.s32.totalorder %s24, 0
      %p108 = por %p106, %p107
      %p109 = scmp.ne.s32.totalorder %s97, %s98
      %p110 = scmp.eq.s32.totalorder %s25, 3
      %p111 = por %p109, %p110
      %p113 = scmp.ne.s32.totalorder %s98, %s112
      %p114 = scmp.eq.s32.totalorder %s25, 0
      %p115 = por %p113, %p114
      %s117 = sadd.s32 %s116, 1
      %p120 = scmp.eq.s32.totalorder %s19, 3
      %p121 = scmp.ne.s32.totalorder %s116, %s118
      %p122 = scmp.eq.s32.totalorder %s19, 0
      %p123 = por %p121, %p122
      %p124 = scmp.ne.s32.totalorder %s116, %s118
      %p125 = scmp.eq.s32.totalorder %s24, 3
      %p126 = por %p124, %p125
      %p127 = scmp.ne.s32.totalorder %s118, %s119
      %p128 = scmp.eq.s32.totalorder %s24, 0
      %p129 = por %p127, %p128
      %p130 = scmp.ne.s32.totalorder %s118, %s119
      %p131 = scmp.eq.s32.totalorder %s25, 3
      %p132 = por %p130, %p131
      %p134 = scmp.ne.s32.totalorder %s119, %s133
      %p135 = scmp.eq.s32.totalorder %s25, 0
      %p136 = por %p134, %p135
      %s137 = ssub.s32 %s19, %s26
      %p138 = scmp.eq.s32.totalorder %s137, 0
      %s140 = sadd.s32 %s139, 1
      %s141 = scalar_select %p138, %s139, %s140
      %p144 = pneg %p138
      %p145 = scmp.eq.s32.totalorder %s19, 3
      %p146 = por %p144, %p145
      %p147 = scmp.ne.s32.totalorder %s139, %s142
      %p148 = scmp.eq.s32.totalorder %s19, 0
      %p149 = por %p147, %p148
      %p150 = scmp.ne.s32.totalorder %s139, %s142
      %p151 = scmp.eq.s32.totalorder %s24, 3
      %p152 = por %p150, %p151
      %p153 = scmp.ne.s32.totalorder %s142, %s143
      %p154 = scmp.eq.s32.totalorder %s24, 0
      %p155 = por %p153, %p154
      %p156 = scmp.ne.s32.totalorder %s142, %s143
      %p157 = scmp.eq.s32.totalorder %s25, 3
      %p158 = por %p156, %p157
      %p160 = scmp.ne.s32.totalorder %s143, %s159
      %p161 = scmp.eq.s32.totalorder %s25, 0
      %p162 = por %p160, %p161
      %p163 = scmp.le.s32.totalorder 1, %s19
      %p164 = scmp.lt.s32.totalorder %s19, 5
      %p165 = pnand %p163, %p164
      %p166 = pneg %p165
      // Predicated region
      $region9: #{tpu_custom_call.1} parent=5 // pred_check
        _
      $region10: #{tpu_custom_call.1} parent=5 // pred_check_branch
        %168 = sbr.rel (%p165) target = $region12
      $region11: #{tpu_custom_call.1} parent=5 // pred_region
        %s169 = ssub.s32 %s19, 1
        // Predicated region
        $region13: #{tpu_custom_call.1} parent=11 // pred_check
          %p170 = pneg %p66
        $region14: #{tpu_custom_call.1} parent=11 // pred_check_branch
          %172 = sbr.rel (%p170) target = $region16
        $region15: #{tpu_custom_call.1} parent=11 // pred_region
          %174 = vsyncadd [#allocation6], 0
          %s175 = sshll.u32 %s1, 4
          %s176 = int_to_ptr.hbm [resolvable:$true] %s175
          %s177 = sshll.u32 [#allocation5], 4
          %s178 = int_to_ptr.vmem [resolvable:$true] %s177
          %183 = dma.hbm_to_vmem [thread:$0]  %s176, 4096, %s178, [#allocation6], 128, 128, 8
        $region16: #{tpu_custom_call.1} parent=11 // pred_fallthru
          _
        // Predicated region
        $region17: #{tpu_custom_call.1} parent=11 // pred_check
          %p184 = pneg %p87
        $region18: #{tpu_custom_call.1} parent=11 // pred_check_branch
          %186 = sbr.rel (%p184) target = $region20
        $region19: #{tpu_custom_call.1} parent=11 // pred_region
          %188 = vsyncadd [#allocation6], 0
          %s190 = sshll.u32 %s2, 4
          %s191 = int_to_ptr.hbm [resolvable:$true] %s190
          %s192 = sshll.u32 [#allocation7], 4
          %s193 = int_to_ptr.vmem [resolvable:$true] %s192
          %195 = dma.hbm_to_vmem [thread:$0]  %s191, 32, %s193, [#allocation6]
        $region20: #{tpu_custom_call.1} parent=11 // pred_fallthru
          _
        // Predicated region
        $region21: #{tpu_custom_call.1} parent=11 // pred_check
          %p196 = pneg %p108
        $region22: #{tpu_custom_call.1} parent=11 // pred_check_branch
          %198 = sbr.rel (%p196) target = $region24
        $region23: #{tpu_custom_call.1} parent=11 // pred_region
          %200 = vsyncadd [#allocation9], 0
          %s201 = sshll.u32 %s3, 4
          %s202 = int_to_ptr.hbm [resolvable:$true] %s201
          %s203 = sshll.u32 [#allocation8], 4
          %s204 = int_to_ptr.vmem [resolvable:$true] %s203
          %209 = dma.hbm_to_vmem [thread:$0]  %s202, 4096, %s204, [#allocation9], 128, 128, 8
        $region24: #{tpu_custom_call.1} parent=11 // pred_fallthru
          _
        // Predicated region
        $region25: #{tpu_custom_call.1} parent=11 // pred_check
          %p210 = pneg %p129
        $region26: #{tpu_custom_call.1} parent=11 // pred_check_branch
          %212 = sbr.rel (%p210) target = $region28
        $region27: #{tpu_custom_call.1} parent=11 // pred_region
          _
        $region28: #{tpu_custom_call.1} parent=11 // pred_fallthru
          _
      $region12: #{tpu_custom_call.1} parent=5 // pred_fallthru
        _
      %p213 = scmp.lt.s32.totalorder %s19, 4
      // Predicated region
      $region29: #{tpu_custom_call.1} parent=5 // pred_check
        %p214 = pneg %p213
      $region30: #{tpu_custom_call.1} parent=5 // pred_check_branch
        %216 = sbr.rel (%p214) target = $region32
      $region31: #{tpu_custom_call.1} parent=5 // pred_region
        // Predicated region
        $region33: #{tpu_custom_call.1} parent=31 // pred_check
          %p217 = pneg %p39
        $region34: #{tpu_custom_call.1} parent=31 // pred_check_branch
          %219 = sbr.rel (%p217) target = $region36
        $region35: #{tpu_custom_call.1} parent=31 // pred_region
          %s220 = sand.u32 %s29, 1
          %s221 = scalar_lea.sflag [#allocation3], %s220
          %s222 = sand.u32 %s29, 1
          %s223 = smul.addr %s222, 256
          %s224 = scalar_lea.vmem [#allocation2], %s223
          %s225 = smul.u32 32, %s19
          %s226 = ssub.s32 125, %s225
          %p227 = scmp.lt.s32.totalorder %s226, 32
          %s228 = scalar_select %p227, %s226, 32
          %s229 = smul.u32 4, %s228
          %s230 = smul.u32 %s229, 2
          %s231 = ssub.s32 256, %s230
          %s232 = sshll.u32 %s231, 4
          %233 = vsyncadd %s221, %s232
          %p234 = scmp.ne.s32.totalorder 0, %s230
          %s235 = smul.addr %s225, 2
          %s236 = smul.addr %s235, 4
          %s237 = scalar_lea.hbm %s0, %s236
          %s238 = smul.u32 8, %s228
          %s239 = sshll.u32 %s237, 4
          %s240 = int_to_ptr.hbm [resolvable:$true] %s239
          %s241 = sshll.u32 %s224, 4
          %s242 = int_to_ptr.vmem [resolvable:$true] %s241
          %s243 = sshll.u32 %s238, 4
          %247 = dma.hbm_to_vmem [thread:$0]  (%p234), %s240, %s243, %s242, %s221, 128, 128, 8
        $region36: #{tpu_custom_call.1} parent=31 // pred_fallthru
          _
      $region32: #{tpu_custom_call.1} parent=5 // pred_fallthru
        _
      %p248 = scmp.le.s32.totalorder 1, %s19
      %p249 = scmp.lt.s32.totalorder %s19, 5
      %p250 = pnand %p248, %p249
      %p251 = pneg %p250
      // Predicated region
      $region37: #{tpu_custom_call.1} parent=5 // pred_check
        _
      $region38: #{tpu_custom_call.1} parent=5 // pred_check_branch
        %253 = sbr.rel (%p250) target = $region40
      $region39: #{tpu_custom_call.1} parent=5 // pred_region
        %s254 = ssub.s32 %s19, 1
        %s255 = sand.u32 %s32, 1
        %s256 = scalar_lea.sflag [#allocation3], %s255
        %s257 = sand.u32 %s32, 1
        %s258 = smul.addr %s257, 256
        %s259 = scalar_lea.vmem [#allocation2], %s258
        // Predicated region
        $region41: #{tpu_custom_call.1} parent=39 // pred_check
          %p260 = pneg %p45
        $region42: #{tpu_custom_call.1} parent=39 // pred_check_branch
          %262 = sbr.rel (%p260) target = $region44
        $region43: #{tpu_custom_call.1} parent=39 // pred_region
          %264 = dma.done %s256, 4096
        $region44: #{tpu_custom_call.1} parent=39 // pred_fallthru
          _
        // Predicated region
        $region45: #{tpu_custom_call.1} parent=39 // pred_check
          %p265 = pneg %p66
        $region46: #{tpu_custom_call.1} parent=39 // pred_check_branch
          %267 = sbr.rel (%p265) target = $region48
        $region47: #{tpu_custom_call.1} parent=39 // pred_region
          %269 = dma.done [#allocation6], 4096
        $region48: #{tpu_custom_call.1} parent=39 // pred_fallthru
          _
        // Predicated region
        $region49: #{tpu_custom_call.1} parent=39 // pred_check
          %p270 = pneg %p87
        $region50: #{tpu_custom_call.1} parent=39 // pred_check_branch
          %272 = sbr.rel (%p270) target = $region52
        $region51: #{tpu_custom_call.1} parent=39 // pred_region
          %274 = dma.done [#allocation6], 32
        $region52: #{tpu_custom_call.1} parent=39 // pred_fallthru
          _
        // Predicated region
        $region53: #{tpu_custom_call.1} parent=39 // pred_check
          %p275 = pneg %p108
        $region54: #{tpu_custom_call.1} parent=39 // pred_check_branch
          %277 = sbr.rel (%p275) target = $region56
        $region55: #{tpu_custom_call.1} parent=39 // pred_region
          %279 = dma.done [#allocation9], 4096
        $region56: #{tpu_custom_call.1} parent=39 // pred_fallthru
          _
        %s280 = sand.u32 %s32, 1
        %s281 = scalar_lea.sflag [#allocation3], %s280
        %s282 = sand.u32 %s32, 1
        %s283 = smul.addr %s282, 256
        %s284 = scalar_lea.vmem [#allocation2], %s283
        %p285 = pneg %p45
        %p286 = pneg %p42
        %p287 = pneg %p66
        %p288 = pneg %p63
        %p289 = pneg %p87
        %p290 = pneg %p84
        %p291 = pneg %p108
        %p292 = pneg %p105
        %p293 = pneg %p129
        %p294 = pneg %p126
        %p295 = pneg %p155
        %p296 = pneg %p152
        %s297 = sand.u32 %s142, 1
        %s298 = scalar_lea.sflag [#allocation4], %s297
        %s299 = sand.u32 %s142, 1
        %s300 = smul.addr %s299, 256
        %s301 = scalar_lea.vmem [#allocation10], %s300
        %s302 = smul.u32 32, %s24
        %s303 = ssub.s32 125, %s302
        %p304 = scmp.lt.s32.totalorder %s303, 32
        %s305 = scalar_select %p304, %s303, 32
        %s306 = smul.u32 4, %s305
        %s307 = smul.u32 %s306, 2
        %s308 = smul.u32 32, %s24
        %s309 = ssub.s32 125, %s308
        %p310 = scmp.lt.s32.totalorder %s309, 32
        %s311 = scalar_select %p310, %s309, 32
        %s312 = smul.u32 4, %s311
        %s313 = smul.u32 %s312, 2
        %v314 = vld [vmem:[%s259] sm:$0xff]
        %v315 = vld [vmem:[%s259 + $0x8] sm:$0xff]
        %v316 = vld [vmem:[%s259 + $0x10] sm:$0xff]
        %v317 = vld [vmem:[%s259 + $0x18] sm:$0xff]
        %v318 = vld [vmem:[%s259 + $0x20] sm:$0xff]
        %v319 = vld [vmem:[%s259 + $0x28] sm:$0xff]
        %v320 = vld [vmem:[%s259 + $0x30] sm:$0xff]
        %v321 = vld [vmem:[%s259 + $0x38] sm:$0xff]
        %v322 = vld [vmem:[%s259 + $0x40] sm:$0xff]
        %v323 = vld [vmem:[%s259 + $0x48] sm:$0xff]
        %v324 = vld [vmem:[%s259 + $0x50] sm:$0xff]
        %v325 = vld [vmem:[%s259 + $0x58] sm:$0xff]
        %v326 = vld [vmem:[%s259 + $0x60] sm:$0xff]
        %v327 = vld [vmem:[%s259 + $0x68] sm:$0xff]
        %v328 = vld [vmem:[%s259 + $0x70] sm:$0xff]
        %v329 = vld [vmem:[%s259 + $0x78] sm:$0xff]
        %v330 = vld [vmem:[%s259 + $0x80] sm:$0xff]
        %v331 = vld [vmem:[%s259 + $0x88] sm:$0xff]
        %v332 = vld [vmem:[%s259 + $0x90] sm:$0xff]
        %v333 = vld [vmem:[%s259 + $0x98] sm:$0xff]
        %v334 = vld [vmem:[%s259 + $0xa0] sm:$0xff]
        %v335 = vld [vmem:[%s259 + $0xa8] sm:$0xff]
        %v336 = vld [vmem:[%s259 + $0xb0] sm:$0xff]
        %v337 = vld [vmem:[%s259 + $0xb8] sm:$0xff]
        %v338 = vld [vmem:[%s259 + $0xc0] sm:$0xff]
        %v339 = vld [vmem:[%s259 + $0xc8] sm:$0xff]
        %v340 = vld [vmem:[%s259 + $0xd0] sm:$0xff]
        %v341 = vld [vmem:[%s259 + $0xd8] sm:$0xff]
        %v342 = vld [vmem:[%s259 + $0xe0] sm:$0xff]
        %v343 = vld [vmem:[%s259 + $0xe8] sm:$0xff]
        %v344 = vld [vmem:[%s259 + $0xf0] sm:$0xff]
        %v345 = vld [vmem:[%s259 + $0xf8] sm:$0xff]
        %v346 = vld [vmem:[#allocation5] sm:$0xff]
        %v347 = vld [vmem:[#allocation5 + $0x8] sm:$0xff]
        %v348 = vld [vmem:[#allocation5 + $0x10] sm:$0xff]
        %v349 = vld [vmem:[#allocation5 + $0x18] sm:$0xff]
        %v350 = vld [vmem:[#allocation5 + $0x20] sm:$0xff]
        %v351 = vld [vmem:[#allocation5 + $0x28] sm:$0xff]
        %v352 = vld [vmem:[#allocation5 + $0x30] sm:$0xff]
        %v353 = vld [vmem:[#allocation5 + $0x38] sm:$0xff]
        %v354 = vld [vmem:[#allocation5 + $0x40] sm:$0xff]
        %v355 = vld [vmem:[#allocation5 + $0x48] sm:$0xff]
        %v356 = vld [vmem:[#allocation5 + $0x50] sm:$0xff]
        %v357 = vld [vmem:[#allocation5 + $0x58] sm:$0xff]
        %v358 = vld [vmem:[#allocation5 + $0x60] sm:$0xff]
        %v359 = vld [vmem:[#allocation5 + $0x68] sm:$0xff]
        %v360 = vld [vmem:[#allocation5 + $0x70] sm:$0xff]
        %v361 = vld [vmem:[#allocation5 + $0x78] sm:$0xff]
        %v362 = vld [vmem:[#allocation5 + $0x80] sm:$0xff]
        %v363 = vld [vmem:[#allocation5 + $0x88] sm:$0xff]
        %v364 = vld [vmem:[#allocation5 + $0x90] sm:$0xff]
        %v365 = vld [vmem:[#allocation5 + $0x98] sm:$0xff]
        %v366 = vld [vmem:[#allocation5 + $0xa0] sm:$0xff]
        %v367 = vld [vmem:[#allocation5 + $0xa8] sm:$0xff]
        %v368 = vld [vmem:[#allocation5 + $0xb0] sm:$0xff]
        %v369 = vld [vmem:[#allocation5 + $0xb8] sm:$0xff]
        %v370 = vld [vmem:[#allocation5 + $0xc0] sm:$0xff]
        %v371 = vld [vmem:[#allocation5 + $0xc8] sm:$0xff]
        %v372 = vld [vmem:[#allocation5 + $0xd0] sm:$0xff]
        %v373 = vld [vmem:[#allocation5 + $0xd8] sm:$0xff]
        %v374 = vld [vmem:[#allocation5 + $0xe0] sm:$0xff]
        %v375 = vld [vmem:[#allocation5 + $0xe8] sm:$0xff]
        %v376 = vld [vmem:[#allocation5 + $0xf0] sm:$0xff]
        %v377 = vld [vmem:[#allocation5 + $0xf8] sm:$0xff]
        %v378 = vld [vmem:[#allocation7] sm:$0x3]
        %v380 = vperm.slane %v378, 0
        %v381 = vperm.slane %v378, 1
        %v416 = vunpack.c.l.b16 %v314
        %v417 = vunpack.c.h.b16 %v314
        %v418 = vunpack.c.l.b16 %v315
        %v419 = vunpack.c.h.b16 %v315
        %v420 = vunpack.c.l.b16 %v316
        %v421 = vunpack.c.h.b16 %v316
        %v422 = vunpack.c.l.b16 %v317
        %v423 = vunpack.c.h.b16 %v317
        %v424 = vunpack.c.l.b16 %v318
        %v425 = vunpack.c.h.b16 %v318
        %v426 = vunpack.c.l.b16 %v319
        %v427 = vunpack.c.h.b16 %v319
        %v428 = vunpack.c.l.b16 %v320
        %v429 = vunpack.c.h.b16 %v320
        %v430 = vunpack.c.l.b16 %v321
        %v431 = vunpack.c.h.b16 %v321
        %v432 = vunpack.c.l.b16 %v322
        %v433 = vunpack.c.h.b16 %v322
        %v434 = vunpack.c.l.b16 %v323
        %v435 = vunpack.c.h.b16 %v323
        %v436 = vunpack.c.l.b16 %v324
        %v437 = vunpack.c.h.b16 %v324
        %v438 = vunpack.c.l.b16 %v325
        %v439 = vunpack.c.h.b16 %v325
        %v440 = vunpack.c.l.b16 %v326
        %v441 = vunpack.c.h.b16 %v326
        %v442 = vunpack.c.l.b16 %v327
        %v443 = vunpack.c.h.b16 %v327
        %v444 = vunpack.c.l.b16 %v328
        %v445 = vunpack.c.h.b16 %v328
        %v446 = vunpack.c.l.b16 %v329
        %v447 = vunpack.c.h.b16 %v329
        %v448 = vunpack.c.l.b16 %v330
        %v449 = vunpack.c.h.b16 %v330
        %v450 = vunpack.c.l.b16 %v331
        %v451 = vunpack.c.h.b16 %v331
        %v452 = vunpack.c.l.b16 %v332
        %v453 = vunpack.c.h.b16 %v332
        %v454 = vunpack.c.l.b16 %v333
        %v455 = vunpack.c.h.b16 %v333
        %v456 = vunpack.c.l.b16 %v334
        %v457 = vunpack.c.h.b16 %v334
        %v458 = vunpack.c.l.b16 %v335
        %v459 = vunpack.c.h.b16 %v335
        %v460 = vunpack.c.l.b16 %v336
        %v461 = vunpack.c.h.b16 %v336
        %v462 = vunpack.c.l.b16 %v337
        %v463 = vunpack.c.h.b16 %v337
        %v464 = vunpack.c.l.b16 %v338
        %v465 = vunpack.c.h.b16 %v338
        %v466 = vunpack.c.l.b16 %v339
        %v467 = vunpack.c.h.b16 %v339
        %v468 = vunpack.c.l.b16 %v340
        %v469 = vunpack.c.h.b16 %v340
        %v470 = vunpack.c.l.b16 %v341
        %v471 = vunpack.c.h.b16 %v341
        %v472 = vunpack.c.l.b16 %v342
        %v473 = vunpack.c.h.b16 %v342
        %v474 = vunpack.c.l.b16 %v343
        %v475 = vunpack.c.h.b16 %v343
        %v476 = vunpack.c.l.b16 %v344
        %v477 = vunpack.c.h.b16 %v344
        %v478 = vunpack.c.l.b16 %v345
        %v479 = vunpack.c.h.b16 %v345
        %v480 = vpack.c.b16 %v418, %v416
        %v481 = vpack.c.b16 %v419, %v417
        %v482 = vpack.c.b16 %v422, %v420
        %v483 = vpack.c.b16 %v423, %v421
        %v484 = vpack.c.b16 %v426, %v424
        %v485 = vpack.c.b16 %v427, %v425
        %v486 = vpack.c.b16 %v430, %v428
        %v487 = vpack.c.b16 %v431, %v429
        %v488 = vpack.c.b16 %v434, %v432
        %v489 = vpack.c.b16 %v435, %v433
        %v490 = vpack.c.b16 %v438, %v436
        %v491 = vpack.c.b16 %v439, %v437
        %v492 = vpack.c.b16 %v442, %v440
        %v493 = vpack.c.b16 %v443, %v441
        %v494 = vpack.c.b16 %v446, %v444
        %v495 = vpack.c.b16 %v447, %v445
        %v496 = vpack.c.b16 %v450, %v448
        %v497 = vpack.c.b16 %v451, %v449
        %v498 = vpack.c.b16 %v454, %v452
        %v499 = vpack.c.b16 %v455, %v453
        %v500 = vpack.c.b16 %v458, %v456
        %v501 = vpack.c.b16 %v459, %v457
        %v502 = vpack.c.b16 %v462, %v460
        %v503 = vpack.c.b16 %v463, %v461
        %v504 = vpack.c.b16 %v466, %v464
        %v505 = vpack.c.b16 %v467, %v465
        %v506 = vpack.c.b16 %v470, %v468
        %v507 = vpack.c.b16 %v471, %v469
        %v508 = vpack.c.b16 %v474, %v472
        %v509 = vpack.c.b16 %v475, %v473
        %v510 = vpack.c.b16 %v478, %v476
        %v511 = vpack.c.b16 %v479, %v477
        %v576 = vunpack.c.l.b16 %v346
        %v577 = vunpack.c.h.b16 %v346
        %v578 = vunpack.c.l.b16 %v347
        %v579 = vunpack.c.h.b16 %v347
        %v580 = vunpack.c.l.b16 %v348
        %v581 = vunpack.c.h.b16 %v348
        %v582 = vunpack.c.l.b16 %v349
        %v583 = vunpack.c.h.b16 %v349
        %v584 = vunpack.c.l.b16 %v350
        %v585 = vunpack.c.h.b16 %v350
        %v586 = vunpack.c.l.b16 %v351
        %v587 = vunpack.c.h.b16 %v351
        %v588 = vunpack.c.l.b16 %v352
        %v589 = vunpack.c.h.b16 %v352
        %v590 = vunpack.c.l.b16 %v353
        %v591 = vunpack.c.h.b16 %v353
        %v592 = vunpack.c.l.b16 %v354
        %v593 = vunpack.c.h.b16 %v354
        %v594 = vunpack.c.l.b16 %v355
        %v595 = vunpack.c.h.b16 %v355
        %v596 = vunpack.c.l.b16 %v356
        %v597 = vunpack.c.h.b16 %v356
        %v598 = vunpack.c.l.b16 %v357
        %v599 = vunpack.c.h.b16 %v357
        %v600 = vunpack.c.l.b16 %v358
        %v601 = vunpack.c.h.b16 %v358
        %v602 = vunpack.c.l.b16 %v359
        %v603 = vunpack.c.h.b16 %v359
        %v604 = vunpack.c.l.b16 %v360
        %v605 = vunpack.c.h.b16 %v360
        %v606 = vunpack.c.l.b16 %v361
        %v607 = vunpack.c.h.b16 %v361
        %v608 = vunpack.c.l.b16 %v362
        %v609 = vunpack.c.h.b16 %v362
        %v610 = vunpack.c.l.b16 %v363
        %v611 = vunpack.c.h.b16 %v363
        %v612 = vunpack.c.l.b16 %v364
        %v613 = vunpack.c.h.b16 %v364
        %v614 = vunpack.c.l.b16 %v365
        %v615 = vunpack.c.h.b16 %v365
        %v616 = vunpack.c.l.b16 %v366
        %v617 = vunpack.c.h.b16 %v366
        %v618 = vunpack.c.l.b16 %v367
        %v619 = vunpack.c.h.b16 %v367
        %v620 = vunpack.c.l.b16 %v368
        %v621 = vunpack.c.h.b16 %v368
        %v622 = vunpack.c.l.b16 %v369
        %v623 = vunpack.c.h.b16 %v369
        %v624 = vunpack.c.l.b16 %v370
        %v625 = vunpack.c.h.b16 %v370
        %v626 = vunpack.c.l.b16 %v371
        %v627 = vunpack.c.h.b16 %v371
        %v628 = vunpack.c.l.b16 %v372
        %v629 = vunpack.c.h.b16 %v372
        %v630 = vunpack.c.l.b16 %v373
        %v631 = vunpack.c.h.b16 %v373
        %v632 = vunpack.c.l.b16 %v374
        %v633 = vunpack.c.h.b16 %v374
        %v634 = vunpack.c.l.b16 %v375
        %v635 = vunpack.c.h.b16 %v375
        %v636 = vunpack.c.l.b16 %v376
        %v637 = vunpack.c.h.b16 %v376
        %v638 = vunpack.c.l.b16 %v377
        %v639 = vunpack.c.h.b16 %v377
        %v640 = vpack.c.b16 %v578, %v576
        %v641 = vpack.c.b16 %v579, %v577
        %v642 = vpack.c.b16 %v582, %v580
        %v643 = vpack.c.b16 %v583, %v581
        %v644 = vpack.c.b16 %v586, %v584
        %v645 = vpack.c.b16 %v587, %v585
        %v646 = vpack.c.b16 %v590, %v588
        %v647 = vpack.c.b16 %v591, %v589
        %v648 = vpack.c.b16 %v594, %v592
        %v649 = vpack.c.b16 %v595, %v593
        %v650 = vpack.c.b16 %v598, %v596
        %v651 = vpack.c.b16 %v599, %v597
        %v652 = vpack.c.b16 %v602, %v600
        %v653 = vpack.c.b16 %v603, %v601
        %v654 = vpack.c.b16 %v606, %v604
        %v655 = vpack.c.b16 %v607, %v605
        %v656 = vpack.c.b16 %v610, %v608
        %v657 = vpack.c.b16 %v611, %v609
        %v658 = vpack.c.b16 %v614, %v612
        %v659 = vpack.c.b16 %v615, %v613
        %v660 = vpack.c.b16 %v618, %v616
        %v661 = vpack.c.b16 %v619, %v617
        %v662 = vpack.c.b16 %v622, %v620
        %v663 = vpack.c.b16 %v623, %v621
        %v664 = vpack.c.b16 %v626, %v624
        %v665 = vpack.c.b16 %v627, %v625
        %v666 = vpack.c.b16 %v630, %v628
        %v667 = vpack.c.b16 %v631, %v629
        %v668 = vpack.c.b16 %v634, %v632
        %v669 = vpack.c.b16 %v635, %v633
        %v670 = vpack.c.b16 %v638, %v636
        %v671 = vpack.c.b16 %v639, %v637
        %704 = vmatpush.bf16.msra.mxu0 %v654
        %705 = vmatpush.bf16.msra.mxu0 %v652
        %706 = vmatpush.bf16.msra.mxu0 %v650
        %707 = vmatpush.bf16.msra.mxu0 %v648
        %708 = vmatpush.bf16.msra.mxu0 %v646
        %709 = vmatpush.bf16.msra.mxu0 %v644
        %710 = vmatpush.bf16.msra.mxu0 %v642
        %711 = vmatpush.bf16.msra.mxu0 %v640
        %712 = vmatmul.bf16.gmra.mxu0 %v480
        %v713 = vpop.f32.mrf.mxu0
        %v714 = vadd.f32 %v380, %v713
        %v715 = vpop.f32.mrf.mxu0
        %v716 = vadd.f32 %v380, %v715
        %717 = vmatmul.bf16.gmra.mxu0 %v482
        %v718 = vpop.f32.mrf.mxu0
        %v719 = vadd.f32 %v380, %v718
        %v720 = vpop.f32.mrf.mxu0
        %v721 = vadd.f32 %v380, %v720
        %722 = vmatmul.bf16.gmra.mxu0 %v484
        %v723 = vpop.f32.mrf.mxu0
        %v724 = vadd.f32 %v380, %v723
        %v725 = vpop.f32.mrf.mxu0
        %v726 = vadd.f32 %v380, %v725
        %727 = vmatmul.bf16.gmra.mxu0 %v486
        %v728 = vpop.f32.mrf.mxu0
        %v729 = vadd.f32 %v380, %v728
        %v730 = vpop.f32.mrf.mxu0
        %v731 = vadd.f32 %v380, %v730
        %732 = vmatmul.bf16.gmra.mxu0 %v488
        %v733 = vpop.f32.mrf.mxu0
        %v734 = vadd.f32 %v380, %v733
        %v735 = vpop.f32.mrf.mxu0
        %v736 = vadd.f32 %v380, %v735
        %737 = vmatmul.bf16.gmra.mxu0 %v490
        %v738 = vpop.f32.mrf.mxu0
        %v739 = vadd.f32 %v380, %v738
        %v740 = vpop.f32.mrf.mxu0
        %v741 = vadd.f32 %v380, %v740
        %742 = vmatmul.bf16.gmra.mxu0 %v492
        %v743 = vpop.f32.mrf.mxu0
        %v744 = vadd.f32 %v380, %v743
        %v745 = vpop.f32.mrf.mxu0
        %v746 = vadd.f32 %v380, %v745
        %747 = vmatmul.bf16.gmra.mxu0 %v494
        %v748 = vpop.f32.mrf.mxu0
        %v749 = vadd.f32 %v380, %v748
        %v750 = vpop.f32.mrf.mxu0
        %v751 = vadd.f32 %v380, %v750
        %752 = vmatmul.bf16.gmra.mxu0 %v496
        %v753 = vpop.f32.mrf.mxu0
        %v754 = vadd.f32 %v380, %v753
        %v755 = vpop.f32.mrf.mxu0
        %v756 = vadd.f32 %v380, %v755
        %757 = vmatmul.bf16.gmra.mxu0 %v498
        %v758 = vpop.f32.mrf.mxu0
        %v759 = vadd.f32 %v380, %v758
        %v760 = vpop.f32.mrf.mxu0
        %v761 = vadd.f32 %v380, %v760
        %762 = vmatmul.bf16.gmra.mxu0 %v500
        %v763 = vpop.f32.mrf.mxu0
        %v764 = vadd.f32 %v380, %v763
        %v765 = vpop.f32.mrf.mxu0
        %v766 = vadd.f32 %v380, %v765
        %767 = vmatmul.bf16.gmra.mxu0 %v502
        %v768 = vpop.f32.mrf.mxu0
        %v769 = vadd.f32 %v380, %v768
        %v770 = vpop.f32.mrf.mxu0
        %v771 = vadd.f32 %v380, %v770
        %772 = vmatmul.bf16.gmra.mxu0 %v504
        %v773 = vpop.f32.mrf.mxu0
        %v774 = vadd.f32 %v380, %v773
        %v775 = vpop.f32.mrf.mxu0
        %v776 = vadd.f32 %v380, %v775
        %777 = vmatmul.bf16.gmra.mxu0 %v506
        %v778 = vpop.f32.mrf.mxu0
        %v779 = vadd.f32 %v380, %v778
        %v780 = vpop.f32.mrf.mxu0
        %v781 = vadd.f32 %v380, %v780
        %782 = vmatmul.bf16.gmra.mxu0 %v508
        %v783 = vpop.f32.mrf.mxu0
        %v784 = vadd.f32 %v380, %v783
        %v785 = vpop.f32.mrf.mxu0
        %v786 = vadd.f32 %v380, %v785
        %787 = vmatmul.bf16.gmra.mxu0 %v510
        %v788 = vpop.f32.mrf.mxu0
        %v789 = vadd.f32 %v380, %v788
        %v790 = vpop.f32.mrf.mxu0
        %v791 = vadd.f32 %v380, %v790
        %792 = vdwg.mxu0
        %793 = vmatpush.bf16.msra.mxu0 %v670
        %794 = vmatpush.bf16.msra.mxu0 %v668
        %795 = vmatpush.bf16.msra.mxu0 %v666
        %796 = vmatpush.bf16.msra.mxu0 %v664
        %797 = vmatpush.bf16.msra.mxu0 %v662
        %798 = vmatpush.bf16.msra.mxu0 %v660
        %799 = vmatpush.bf16.msra.mxu0 %v658
        %800 = vmatpush.bf16.msra.mxu0 %v656
        %801 = vmatmul.bf16.gmra.mxu0 %v481
        %v802 = vpop.f32.mrf.mxu0
        %v803 = vadd.f32 %v714, %v802
        %v804 = vpop.f32.mrf.mxu0
        %v805 = vadd.f32 %v716, %v804
        %806 = vmatmul.bf16.gmra.mxu0 %v483
        %v807 = vpop.f32.mrf.mxu0
        %v808 = vadd.f32 %v719, %v807
        %v809 = vpop.f32.mrf.mxu0
        %v810 = vadd.f32 %v721, %v809
        %811 = vmatmul.bf16.gmra.mxu0 %v485
        %v812 = vpop.f32.mrf.mxu0
        %v813 = vadd.f32 %v724, %v812
        %v814 = vpop.f32.mrf.mxu0
        %v815 = vadd.f32 %v726, %v814
        %816 = vmatmul.bf16.gmra.mxu0 %v487
        %v817 = vpop.f32.mrf.mxu0
        %v818 = vadd.f32 %v729, %v817
        %v819 = vpop.f32.mrf.mxu0
        %v820 = vadd.f32 %v731, %v819
        %821 = vmatmul.bf16.gmra.mxu0 %v489
        %v822 = vpop.f32.mrf.mxu0
        %v823 = vadd.f32 %v734, %v822
        %v824 = vpop.f32.mrf.mxu0
        %v825 = vadd.f32 %v736, %v824
        %826 = vmatmul.bf16.gmra.mxu0 %v491
        %v827 = vpop.f32.mrf.mxu0
        %v828 = vadd.f32 %v739, %v827
        %v829 = vpop.f32.mrf.mxu0
        %v830 = vadd.f32 %v741, %v829
        %831 = vmatmul.bf16.gmra.mxu0 %v493
        %v832 = vpop.f32.mrf.mxu0
        %v833 = vadd.f32 %v744, %v832
        %v834 = vpop.f32.mrf.mxu0
        %v835 = vadd.f32 %v746, %v834
        %836 = vmatmul.bf16.gmra.mxu0 %v495
        %v837 = vpop.f32.mrf.mxu0
        %v838 = vadd.f32 %v749, %v837
        %v839 = vpop.f32.mrf.mxu0
        %v840 = vadd.f32 %v751, %v839
        %841 = vmatmul.bf16.gmra.mxu0 %v497
        %v842 = vpop.f32.mrf.mxu0
        %v843 = vadd.f32 %v754, %v842
        %v844 = vpop.f32.mrf.mxu0
        %v845 = vadd.f32 %v756, %v844
        %846 = vmatmul.bf16.gmra.mxu0 %v499
        %v847 = vpop.f32.mrf.mxu0
        %v848 = vadd.f32 %v759, %v847
        %v849 = vpop.f32.mrf.mxu0
        %v850 = vadd.f32 %v761, %v849
        %851 = vmatmul.bf16.gmra.mxu0 %v501
        %v852 = vpop.f32.mrf.mxu0
        %v853 = vadd.f32 %v764, %v852
        %v854 = vpop.f32.mrf.mxu0
        %v855 = vadd.f32 %v766, %v854
        %856 = vmatmul.bf16.gmra.mxu0 %v503
        %v857 = vpop.f32.mrf.mxu0
        %v858 = vadd.f32 %v769, %v857
        %v859 = vpop.f32.mrf.mxu0
        %v860 = vadd.f32 %v771, %v859
        %861 = vmatmul.bf16.gmra.mxu0 %v505
        %v862 = vpop.f32.mrf.mxu0
        %v863 = vadd.f32 %v774, %v862
        %v864 = vpop.f32.mrf.mxu0
        %v865 = vadd.f32 %v776, %v864
        %866 = vmatmul.bf16.gmra.mxu0 %v507
        %v867 = vpop.f32.mrf.mxu0
        %v868 = vadd.f32 %v779, %v867
        %v869 = vpop.f32.mrf.mxu0
        %v870 = vadd.f32 %v781, %v869
        %871 = vmatmul.bf16.gmra.mxu0 %v509
        %v872 = vpop.f32.mrf.mxu0
        %v873 = vadd.f32 %v784, %v872
        %v874 = vpop.f32.mrf.mxu0
        %v875 = vadd.f32 %v786, %v874
        %876 = vmatmul.bf16.gmra.mxu0 %v511
        %v877 = vpop.f32.mrf.mxu0
        %v878 = vadd.f32 %v789, %v877
        %v879 = vpop.f32.mrf.mxu0
        %v880 = vadd.f32 %v791, %v879
        %881 = vdwg.mxu0
        %882 = vmatpush.bf16.msra.mxu0 %v655
        %883 = vmatpush.bf16.msra.mxu0 %v653
        %884 = vmatpush.bf16.msra.mxu0 %v651
        %885 = vmatpush.bf16.msra.mxu0 %v649
        %886 = vmatpush.bf16.msra.mxu0 %v647
        %887 = vmatpush.bf16.msra.mxu0 %v645
        %888 = vmatpush.bf16.msra.mxu0 %v643
        %889 = vmatpush.bf16.msra.mxu0 %v641
        %890 = vmatmul.bf16.gmra.mxu0 %v480
        %v891 = vpop.f32.mrf.mxu0
        %v892 = vadd.f32 %v381, %v891
        %v893 = vpop.f32.mrf.mxu0
        %v894 = vadd.f32 %v381, %v893
        %895 = vmatmul.bf16.gmra.mxu0 %v482
        %v896 = vpop.f32.mrf.mxu0
        %v897 = vadd.f32 %v381, %v896
        %v898 = vpop.f32.mrf.mxu0
        %v899 = vadd.f32 %v381, %v898
        %900 = vmatmul.bf16.gmra.mxu0 %v484
        %v901 = vpop.f32.mrf.mxu0
        %v902 = vadd.f32 %v381, %v901
        %v903 = vpop.f32.mrf.mxu0
        %v904 = vadd.f32 %v381, %v903
        %905 = vmatmul.bf16.gmra.mxu0 %v486
        %v906 = vpop.f32.mrf.mxu0
        %v907 = vadd.f32 %v381, %v906
        %v908 = vpop.f32.mrf.mxu0
        %v909 = vadd.f32 %v381, %v908
        %910 = vmatmul.bf16.gmra.mxu0 %v488
        %v911 = vpop.f32.mrf.mxu0
        %v912 = vadd.f32 %v381, %v911
        %v913 = vpop.f32.mrf.mxu0
        %v914 = vadd.f32 %v381, %v913
        %915 = vmatmul.bf16.gmra.mxu0 %v490
        %v916 = vpop.f32.mrf.mxu0
        %v917 = vadd.f32 %v381, %v916
        %v918 = vpop.f32.mrf.mxu0
        %v919 = vadd.f32 %v381, %v918
        %920 = vmatmul.bf16.gmra.mxu0 %v492
        %v921 = vpop.f32.mrf.mxu0
        %v922 = vadd.f32 %v381, %v921
        %v923 = vpop.f32.mrf.mxu0
        %v924 = vadd.f32 %v381, %v923
        %925 = vmatmul.bf16.gmra.mxu0 %v494
        %v926 = vpop.f32.mrf.mxu0
        %v927 = vadd.f32 %v381, %v926
        %v928 = vpop.f32.mrf.mxu0
        %v929 = vadd.f32 %v381, %v928
        %930 = vmatmul.bf16.gmra.mxu0 %v496
        %v931 = vpop.f32.mrf.mxu0
        %v932 = vadd.f32 %v381, %v931
        %v933 = vpop.f32.mrf.mxu0
        %v934 = vadd.f32 %v381, %v933
        %935 = vmatmul.bf16.gmra.mxu0 %v498
        %v936 = vpop.f32.mrf.mxu0
        %v937 = vadd.f32 %v381, %v936
        %v938 = vpop.f32.mrf.mxu0
        %v939 = vadd.f32 %v381, %v938
        %940 = vmatmul.bf16.gmra.mxu0 %v500
        %v941 = vpop.f32.mrf.mxu0
        %v942 = vadd.f32 %v381, %v941
        %v943 = vpop.f32.mrf.mxu0
        %v944 = vadd.f32 %v381, %v943
        %945 = vmatmul.bf16.gmra.mxu0 %v502
        %v946 = vpop.f32.mrf.mxu0
        %v947 = vadd.f32 %v381, %v946
        %v948 = vpop.f32.mrf.mxu0
        %v949 = vadd.f32 %v381, %v948
        %950 = vmatmul.bf16.gmra.mxu0 %v504
        %v951 = vpop.f32.mrf.mxu0
        %v952 = vadd.f32 %v381, %v951
        %v953 = vpop.f32.mrf.mxu0
        %v954 = vadd.f32 %v381, %v953
        %955 = vmatmul.bf16.gmra.mxu0 %v506
        %v956 = vpop.f32.mrf.mxu0
        %v957 = vadd.f32 %v381, %v956
        %v958 = vpop.f32.mrf.mxu0
        %v959 = vadd.f32 %v381, %v958
        %960 = vmatmul.bf16.gmra.mxu0 %v508
        %v961 = vpop.f32.mrf.mxu0
        %v962 = vadd.f32 %v381, %v961
        %v963 = vpop.f32.mrf.mxu0
        %v964 = vadd.f32 %v381, %v963
        %965 = vmatmul.bf16.gmra.mxu0 %v510
        %v966 = vpop.f32.mrf.mxu0
        %v967 = vadd.f32 %v381, %v966
        %v968 = vpop.f32.mrf.mxu0
        %v969 = vadd.f32 %v381, %v968
        %970 = vdwg.mxu0
        %971 = vmatpush.bf16.msra.mxu0 %v671
        %972 = vmatpush.bf16.msra.mxu0 %v669
        %973 = vmatpush.bf16.msra.mxu0 %v667
        %974 = vmatpush.bf16.msra.mxu0 %v665
        %975 = vmatpush.bf16.msra.mxu0 %v663
        %976 = vmatpush.bf16.msra.mxu0 %v661
        %977 = vmatpush.bf16.msra.mxu0 %v659
        %978 = vmatpush.bf16.msra.mxu0 %v657
        %979 = vmatmul.bf16.gmra.mxu0 %v481
        %v980 = vpop.f32.mrf.mxu0
        %v981 = vadd.f32 %v892, %v980
        %v982 = vpop.f32.mrf.mxu0
        %v983 = vadd.f32 %v894, %v982
        %984 = vmatmul.bf16.gmra.mxu0 %v483
        %v985 = vpop.f32.mrf.mxu0
        %v986 = vadd.f32 %v897, %v985
        %v987 = vpop.f32.mrf.mxu0
        %v988 = vadd.f32 %v899, %v987
        %989 = vmatmul.bf16.gmra.mxu0 %v485
        %v990 = vpop.f32.mrf.mxu0
        %v991 = vadd.f32 %v902, %v990
        %v992 = vpop.f32.mrf.mxu0
        %v993 = vadd.f32 %v904, %v992
        %994 = vmatmul.bf16.gmra.mxu0 %v487
        %v995 = vpop.f32.mrf.mxu0
        %v996 = vadd.f32 %v907, %v995
        %v997 = vpop.f32.mrf.mxu0
        %v998 = vadd.f32 %v909, %v997
        %999 = vmatmul.bf16.gmra.mxu0 %v489
        %v1000 = vpop.f32.mrf.mxu0
        %v1001 = vadd.f32 %v912, %v1000
        %v1002 = vpop.f32.mrf.mxu0
        %v1003 = vadd.f32 %v914, %v1002
        %1004 = vmatmul.bf16.gmra.mxu0 %v491
        %v1005 = vpop.f32.mrf.mxu0
        %v1006 = vadd.f32 %v917, %v1005
        %v1007 = vpop.f32.mrf.mxu0
        %v1008 = vadd.f32 %v919, %v1007
        %1009 = vmatmul.bf16.gmra.mxu0 %v493
        %v1010 = vpop.f32.mrf.mxu0
        %v1011 = vadd.f32 %v922, %v1010
        %v1012 = vpop.f32.mrf.mxu0
        %v1013 = vadd.f32 %v924, %v1012
        %1014 = vmatmul.bf16.gmra.mxu0 %v495
        %v1015 = vpop.f32.mrf.mxu0
        %v1016 = vadd.f32 %v927, %v1015
        %v1017 = vpop.f32.mrf.mxu0
        %v1018 = vadd.f32 %v929, %v1017
        %1019 = vmatmul.bf16.gmra.mxu0 %v497
        %v1020 = vpop.f32.mrf.mxu0
        %v1021 = vadd.f32 %v932, %v1020
        %v1022 = vpop.f32.mrf.mxu0
        %v1023 = vadd.f32 %v934, %v1022
        %1024 = vmatmul.bf16.gmra.mxu0 %v499
        %v1025 = vpop.f32.mrf.mxu0
        %v1026 = vadd.f32 %v937, %v1025
        %v1027 = vpop.f32.mrf.mxu0
        %v1028 = vadd.f32 %v939, %v1027
        %1029 = vmatmul.bf16.gmra.mxu0 %v501
        %v1030 = vpop.f32.mrf.mxu0
        %v1031 = vadd.f32 %v942, %v1030
        %v1032 = vpop.f32.mrf.mxu0
        %v1033 = vadd.f32 %v944, %v1032
        %1034 = vmatmul.bf16.gmra.mxu0 %v503
        %v1035 = vpop.f32.mrf.mxu0
        %v1036 = vadd.f32 %v947, %v1035
        %v1037 = vpop.f32.mrf.mxu0
        %v1038 = vadd.f32 %v949, %v1037
        %1039 = vmatmul.bf16.gmra.mxu0 %v505
        %v1040 = vpop.f32.mrf.mxu0
        %v1041 = vadd.f32 %v952, %v1040
        %v1042 = vpop.f32.mrf.mxu0
        %v1043 = vadd.f32 %v954, %v1042
        %1044 = vmatmul.bf16.gmra.mxu0 %v507
        %v1045 = vpop.f32.mrf.mxu0
        %v1046 = vadd.f32 %v957, %v1045
        %v1047 = vpop.f32.mrf.mxu0
        %v1048 = vadd.f32 %v959, %v1047
        %1049 = vmatmul.bf16.gmra.mxu0 %v509
        %v1050 = vpop.f32.mrf.mxu0
        %v1051 = vadd.f32 %v962, %v1050
        %v1052 = vpop.f32.mrf.mxu0
        %v1053 = vadd.f32 %v964, %v1052
        %1054 = vmatmul.bf16.gmra.mxu0 %v511
        %v1055 = vpop.f32.mrf.mxu0
        %v1056 = vadd.f32 %v967, %v1055
        %v1057 = vpop.f32.mrf.mxu0
        %v1058 = vadd.f32 %v969, %v1057
        %1059 = vdwg.mxu0
        %v1060 = vmax.f32 %v803, 0.0
        %v1061 = vmax.f32 %v981, 0.0
        %v1062 = vmax.f32 %v805, 0.0
        %v1063 = vmax.f32 %v983, 0.0
        %v1064 = vmax.f32 %v808, 0.0
        %v1065 = vmax.f32 %v986, 0.0
        %v1066 = vmax.f32 %v810, 0.0
        %v1067 = vmax.f32 %v988, 0.0
        %v1068 = vmax.f32 %v813, 0.0
        %v1069 = vmax.f32 %v991, 0.0
        %v1070 = vmax.f32 %v815, 0.0
        %v1071 = vmax.f32 %v993, 0.0
        %v1072 = vmax.f32 %v818, 0.0
        %v1073 = vmax.f32 %v996, 0.0
        %v1074 = vmax.f32 %v820, 0.0
        %v1075 = vmax.f32 %v998, 0.0
        %v1076 = vmax.f32 %v823, 0.0
        %v1077 = vmax.f32 %v1001, 0.0
        %v1078 = vmax.f32 %v825, 0.0
        %v1079 = vmax.f32 %v1003, 0.0
        %v1080 = vmax.f32 %v828, 0.0
        %v1081 = vmax.f32 %v1006, 0.0
        %v1082 = vmax.f32 %v830, 0.0
        %v1083 = vmax.f32 %v1008, 0.0
        %v1084 = vmax.f32 %v833, 0.0
        %v1085 = vmax.f32 %v1011, 0.0
        %v1086 = vmax.f32 %v835, 0.0
        %v1087 = vmax.f32 %v1013, 0.0
        %v1088 = vmax.f32 %v838, 0.0
        %v1089 = vmax.f32 %v1016, 0.0
        %v1090 = vmax.f32 %v840, 0.0
        %v1091 = vmax.f32 %v1018, 0.0
        %v1092 = vmax.f32 %v843, 0.0
        %v1093 = vmax.f32 %v1021, 0.0
        %v1094 = vmax.f32 %v845, 0.0
        %v1095 = vmax.f32 %v1023, 0.0
        %v1096 = vmax.f32 %v848, 0.0
        %v1097 = vmax.f32 %v1026, 0.0
        %v1098 = vmax.f32 %v850, 0.0
        %v1099 = vmax.f32 %v1028, 0.0
        %v1100 = vmax.f32 %v853, 0.0
        %v1101 = vmax.f32 %v1031, 0.0
        %v1102 = vmax.f32 %v855, 0.0
        %v1103 = vmax.f32 %v1033, 0.0
        %v1104 = vmax.f32 %v858, 0.0
        %v1105 = vmax.f32 %v1036, 0.0
        %v1106 = vmax.f32 %v860, 0.0
        %v1107 = vmax.f32 %v1038, 0.0
        %v1108 = vmax.f32 %v863, 0.0
        %v1109 = vmax.f32 %v1041, 0.0
        %v1110 = vmax.f32 %v865, 0.0
        %v1111 = vmax.f32 %v1043, 0.0
        %v1112 = vmax.f32 %v868, 0.0
        %v1113 = vmax.f32 %v1046, 0.0
        %v1114 = vmax.f32 %v870, 0.0
        %v1115 = vmax.f32 %v1048, 0.0
        %v1116 = vmax.f32 %v873, 0.0
        %v1117 = vmax.f32 %v1051, 0.0
        %v1118 = vmax.f32 %v875, 0.0
        %v1119 = vmax.f32 %v1053, 0.0
        %v1120 = vmax.f32 %v878, 0.0
        %v1121 = vmax.f32 %v1056, 0.0
        %v1122 = vmax.f32 %v880, 0.0
        %v1123 = vmax.f32 %v1058, 0.0
        %v1124 = vpack.c.bf16 %v1062, %v1060
        %v1125 = vpack.c.bf16 %v1063, %v1061
        %v1126 = vpack.c.bf16 %v1066, %v1064
        %v1127 = vpack.c.bf16 %v1067, %v1065
        %v1128 = vpack.c.bf16 %v1070, %v1068
        %v1129 = vpack.c.bf16 %v1071, %v1069
        %v1130 = vpack.c.bf16 %v1074, %v1072
        %v1131 = vpack.c.bf16 %v1075, %v1073
        %v1132 = vpack.c.bf16 %v1078, %v1076
        %v1133 = vpack.c.bf16 %v1079, %v1077
        %v1134 = vpack.c.bf16 %v1082, %v1080
        %v1135 = vpack.c.bf16 %v1083, %v1081
        %v1136 = vpack.c.bf16 %v1086, %v1084
        %v1137 = vpack.c.bf16 %v1087, %v1085
        %v1138 = vpack.c.bf16 %v1090, %v1088
        %v1139 = vpack.c.bf16 %v1091, %v1089
        %v1140 = vpack.c.bf16 %v1094, %v1092
        %v1141 = vpack.c.bf16 %v1095, %v1093
        %v1142 = vpack.c.bf16 %v1098, %v1096
        %v1143 = vpack.c.bf16 %v1099, %v1097
        %v1144 = vpack.c.bf16 %v1102, %v1100
        %v1145 = vpack.c.bf16 %v1103, %v1101
        %v1146 = vpack.c.bf16 %v1106, %v1104
        %v1147 = vpack.c.bf16 %v1107, %v1105
        %v1148 = vpack.c.bf16 %v1110, %v1108
        %v1149 = vpack.c.bf16 %v1111, %v1109
        %v1150 = vpack.c.bf16 %v1114, %v1112
        %v1151 = vpack.c.bf16 %v1115, %v1113
        %v1152 = vpack.c.bf16 %v1118, %v1116
        %v1153 = vpack.c.bf16 %v1119, %v1117
        %v1154 = vpack.c.bf16 %v1122, %v1120
        %v1155 = vpack.c.bf16 %v1123, %v1121
        %v1156 = vld [vmem:[#allocation8] sm:$0xff]
        %v1157 = vld [vmem:[#allocation8 + $0x8] sm:$0xff]
        %v1158 = vld [vmem:[#allocation8 + $0x10] sm:$0xff]
        %v1159 = vld [vmem:[#allocation8 + $0x18] sm:$0xff]
        %v1160 = vld [vmem:[#allocation8 + $0x20] sm:$0xff]
        %v1161 = vld [vmem:[#allocation8 + $0x28] sm:$0xff]
        %v1162 = vld [vmem:[#allocation8 + $0x30] sm:$0xff]
        %v1163 = vld [vmem:[#allocation8 + $0x38] sm:$0xff]
        %v1164 = vld [vmem:[#allocation8 + $0x40] sm:$0xff]
        %v1165 = vld [vmem:[#allocation8 + $0x48] sm:$0xff]
        %v1166 = vld [vmem:[#allocation8 + $0x50] sm:$0xff]
        %v1167 = vld [vmem:[#allocation8 + $0x58] sm:$0xff]
        %v1168 = vld [vmem:[#allocation8 + $0x60] sm:$0xff]
        %v1169 = vld [vmem:[#allocation8 + $0x68] sm:$0xff]
        %v1170 = vld [vmem:[#allocation8 + $0x70] sm:$0xff]
        %v1171 = vld [vmem:[#allocation8 + $0x78] sm:$0xff]
        %v1172 = vld [vmem:[#allocation8 + $0x80] sm:$0xff]
        %v1173 = vld [vmem:[#allocation8 + $0x88] sm:$0xff]
        %v1174 = vld [vmem:[#allocation8 + $0x90] sm:$0xff]
        %v1175 = vld [vmem:[#allocation8 + $0x98] sm:$0xff]
        %v1176 = vld [vmem:[#allocation8 + $0xa0] sm:$0xff]
        %v1177 = vld [vmem:[#allocation8 + $0xa8] sm:$0xff]
        %v1178 = vld [vmem:[#allocation8 + $0xb0] sm:$0xff]
        %v1179 = vld [vmem:[#allocation8 + $0xb8] sm:$0xff]
        %v1180 = vld [vmem:[#allocation8 + $0xc0] sm:$0xff]
        %v1181 = vld [vmem:[#allocation8 + $0xc8] sm:$0xff]
        %v1182 = vld [vmem:[#allocation8 + $0xd0] sm:$0xff]
        %v1183 = vld [vmem:[#allocation8 + $0xd8] sm:$0xff]
        %v1184 = vld [vmem:[#allocation8 + $0xe0] sm:$0xff]
        %v1185 = vld [vmem:[#allocation8 + $0xe8] sm:$0xff]
        %v1186 = vld [vmem:[#allocation8 + $0xf0] sm:$0xff]
        %v1187 = vld [vmem:[#allocation8 + $0xf8] sm:$0xff]
        %v1188 = vld [vmem:[%s4] sm:$0x3]
        %v1190 = vperm.slane %v1188, 0
        %v1191 = vperm.slane %v1188, 1
        %v1226 = vunpack.c.l.b16 %v1156
        %v1227 = vunpack.c.h.b16 %v1156
        %v1228 = vunpack.c.l.b16 %v1157
        %v1229 = vunpack.c.h.b16 %v1157
        %v1230 = vunpack.c.l.b16 %v1158
        %v1231 = vunpack.c.h.b16 %v1158
        %v1232 = vunpack.c.l.b16 %v1159
        %v1233 = vunpack.c.h.b16 %v1159
        %v1234 = vunpack.c.l.b16 %v1160
        %v1235 = vunpack.c.h.b16 %v1160
        %v1236 = vunpack.c.l.b16 %v1161
        %v1237 = vunpack.c.h.b16 %v1161
        %v1238 = vunpack.c.l.b16 %v1162
        %v1239 = vunpack.c.h.b16 %v1162
        %v1240 = vunpack.c.l.b16 %v1163
        %v1241 = vunpack.c.h.b16 %v1163
        %v1242 = vunpack.c.l.b16 %v1164
        %v1243 = vunpack.c.h.b16 %v1164
        %v1244 = vunpack.c.l.b16 %v1165
        %v1245 = vunpack.c.h.b16 %v1165
        %v1246 = vunpack.c.l.b16 %v1166
        %v1247 = vunpack.c.h.b16 %v1166
        %v1248 = vunpack.c.l.b16 %v1167
        %v1249 = vunpack.c.h.b16 %v1167
        %v1250 = vunpack.c.l.b16 %v1168
        %v1251 = vunpack.c.h.b16 %v1168
        %v1252 = vunpack.c.l.b16 %v1169
        %v1253 = vunpack.c.h.b16 %v1169
        %v1254 = vunpack.c.l.b16 %v1170
        %v1255 = vunpack.c.h.b16 %v1170
        %v1256 = vunpack.c.l.b16 %v1171
        %v1257 = vunpack.c.h.b16 %v1171
        %v1258 = vunpack.c.l.b16 %v1172
        %v1259 = vunpack.c.h.b16 %v1172
        %v1260 = vunpack.c.l.b16 %v1173
        %v1261 = vunpack.c.h.b16 %v1173
        %v1262 = vunpack.c.l.b16 %v1174
        %v1263 = vunpack.c.h.b16 %v1174
        %v1264 = vunpack.c.l.b16 %v1175
        %v1265 = vunpack.c.h.b16 %v1175
        %v1266 = vunpack.c.l.b16 %v1176
        %v1267 = vunpack.c.h.b16 %v1176
        %v1268 = vunpack.c.l.b16 %v1177
        %v1269 = vunpack.c.h.b16 %v1177
        %v1270 = vunpack.c.l.b16 %v1178
        %v1271 = vunpack.c.h.b16 %v1178
        %v1272 = vunpack.c.l.b16 %v1179
        %v1273 = vunpack.c.h.b16 %v1179
        %v1274 = vunpack.c.l.b16 %v1180
        %v1275 = vunpack.c.h.b16 %v1180
        %v1276 = vunpack.c.l.b16 %v1181
        %v1277 = vunpack.c.h.b16 %v1181
        %v1278 = vunpack.c.l.b16 %v1182
        %v1279 = vunpack.c.h.b16 %v1182
        %v1280 = vunpack.c.l.b16 %v1183
        %v1281 = vunpack.c.h.b16 %v1183
        %v1282 = vunpack.c.l.b16 %v1184
        %v1283 = vunpack.c.h.b16 %v1184
        %v1284 = vunpack.c.l.b16 %v1185
        %v1285 = vunpack.c.h.b16 %v1185
        %v1286 = vunpack.c.l.b16 %v1186
        %v1287 = vunpack.c.h.b16 %v1186
        %v1288 = vunpack.c.l.b16 %v1187
        %v1289 = vunpack.c.h.b16 %v1187
        %v1290 = vpack.c.b16 %v1228, %v1226
        %v1291 = vpack.c.b16 %v1229, %v1227
        %v1292 = vpack.c.b16 %v1232, %v1230
        %v1293 = vpack.c.b16 %v1233, %v1231
        %v1294 = vpack.c.b16 %v1236, %v1234
        %v1295 = vpack.c.b16 %v1237, %v1235
        %v1296 = vpack.c.b16 %v1240, %v1238
        %v1297 = vpack.c.b16 %v1241, %v1239
        %v1298 = vpack.c.b16 %v1244, %v1242
        %v1299 = vpack.c.b16 %v1245, %v1243
        %v1300 = vpack.c.b16 %v1248, %v1246
        %v1301 = vpack.c.b16 %v1249, %v1247
        %v1302 = vpack.c.b16 %v1252, %v1250
        %v1303 = vpack.c.b16 %v1253, %v1251
        %v1304 = vpack.c.b16 %v1256, %v1254
        %v1305 = vpack.c.b16 %v1257, %v1255
        %v1306 = vpack.c.b16 %v1260, %v1258
        %v1307 = vpack.c.b16 %v1261, %v1259
        %v1308 = vpack.c.b16 %v1264, %v1262
        %v1309 = vpack.c.b16 %v1265, %v1263
        %v1310 = vpack.c.b16 %v1268, %v1266
        %v1311 = vpack.c.b16 %v1269, %v1267
        %v1312 = vpack.c.b16 %v1272, %v1270
        %v1313 = vpack.c.b16 %v1273, %v1271
        %v1314 = vpack.c.b16 %v1276, %v1274
        %v1315 = vpack.c.b16 %v1277, %v1275
        %v1316 = vpack.c.b16 %v1280, %v1278
        %v1317 = vpack.c.b16 %v1281, %v1279
        %v1318 = vpack.c.b16 %v1284, %v1282
        %v1319 = vpack.c.b16 %v1285, %v1283
        %v1320 = vpack.c.b16 %v1288, %v1286
        %v1321 = vpack.c.b16 %v1289, %v1287
        %1354 = vmatpush.bf16.msra.mxu0 %v1304
        %1355 = vmatpush.bf16.msra.mxu0 %v1302
        %1356 = vmatpush.bf16.msra.mxu0 %v1300
        %1357 = vmatpush.bf16.msra.mxu0 %v1298
        %1358 = vmatpush.bf16.msra.mxu0 %v1296
        %1359 = vmatpush.bf16.msra.mxu0 %v1294
        %1360 = vmatpush.bf16.msra.mxu0 %v1292
        %1361 = vmatpush.bf16.msra.mxu0 %v1290
        %1362 = vmatmul.bf16.gmra.mxu0 %v1124
        %v1363 = vpop.f32.mrf.mxu0
        %v1364 = vadd.f32 %v1190, %v1363
        %v1365 = vpop.f32.mrf.mxu0
        %v1366 = vadd.f32 %v1190, %v1365
        %1367 = vmatmul.bf16.gmra.mxu0 %v1126
        %v1368 = vpop.f32.mrf.mxu0
        %v1369 = vadd.f32 %v1190, %v1368
        %v1370 = vpop.f32.mrf.mxu0
        %v1371 = vadd.f32 %v1190, %v1370
        %1372 = vmatmul.bf16.gmra.mxu0 %v1128
        %v1373 = vpop.f32.mrf.mxu0
        %v1374 = vadd.f32 %v1190, %v1373
        %v1375 = vpop.f32.mrf.mxu0
        %v1376 = vadd.f32 %v1190, %v1375
        %1377 = vmatmul.bf16.gmra.mxu0 %v1130
        %v1378 = vpop.f32.mrf.mxu0
        %v1379 = vadd.f32 %v1190, %v1378
        %v1380 = vpop.f32.mrf.mxu0
        %v1381 = vadd.f32 %v1190, %v1380
        %1382 = vmatmul.bf16.gmra.mxu0 %v1132
        %v1383 = vpop.f32.mrf.mxu0
        %v1384 = vadd.f32 %v1190, %v1383
        %v1385 = vpop.f32.mrf.mxu0
        %v1386 = vadd.f32 %v1190, %v1385
        %1387 = vmatmul.bf16.gmra.mxu0 %v1134
        %v1388 = vpop.f32.mrf.mxu0
        %v1389 = vadd.f32 %v1190, %v1388
        %v1390 = vpop.f32.mrf.mxu0
        %v1391 = vadd.f32 %v1190, %v1390
        %1392 = vmatmul.bf16.gmra.mxu0 %v1136
        %v1393 = vpop.f32.mrf.mxu0
        %v1394 = vadd.f32 %v1190, %v1393
        %v1395 = vpop.f32.mrf.mxu0
        %v1396 = vadd.f32 %v1190, %v1395
        %1397 = vmatmul.bf16.gmra.mxu0 %v1138
        %v1398 = vpop.f32.mrf.mxu0
        %v1399 = vadd.f32 %v1190, %v1398
        %v1400 = vpop.f32.mrf.mxu0
        %v1401 = vadd.f32 %v1190, %v1400
        %1402 = vmatmul.bf16.gmra.mxu0 %v1140
        %v1403 = vpop.f32.mrf.mxu0
        %v1404 = vadd.f32 %v1190, %v1403
        %v1405 = vpop.f32.mrf.mxu0
        %v1406 = vadd.f32 %v1190, %v1405
        %1407 = vmatmul.bf16.gmra.mxu0 %v1142
        %v1408 = vpop.f32.mrf.mxu0
        %v1409 = vadd.f32 %v1190, %v1408
        %v1410 = vpop.f32.mrf.mxu0
        %v1411 = vadd.f32 %v1190, %v1410
        %1412 = vmatmul.bf16.gmra.mxu0 %v1144
        %v1413 = vpop.f32.mrf.mxu0
        %v1414 = vadd.f32 %v1190, %v1413
        %v1415 = vpop.f32.mrf.mxu0
        %v1416 = vadd.f32 %v1190, %v1415
        %1417 = vmatmul.bf16.gmra.mxu0 %v1146
        %v1418 = vpop.f32.mrf.mxu0
        %v1419 = vadd.f32 %v1190, %v1418
        %v1420 = vpop.f32.mrf.mxu0
        %v1421 = vadd.f32 %v1190, %v1420
        %1422 = vmatmul.bf16.gmra.mxu0 %v1148
        %v1423 = vpop.f32.mrf.mxu0
        %v1424 = vadd.f32 %v1190, %v1423
        %v1425 = vpop.f32.mrf.mxu0
        %v1426 = vadd.f32 %v1190, %v1425
        %1427 = vmatmul.bf16.gmra.mxu0 %v1150
        %v1428 = vpop.f32.mrf.mxu0
        %v1429 = vadd.f32 %v1190, %v1428
        %v1430 = vpop.f32.mrf.mxu0
        %v1431 = vadd.f32 %v1190, %v1430
        %1432 = vmatmul.bf16.gmra.mxu0 %v1152
        %v1433 = vpop.f32.mrf.mxu0
        %v1434 = vadd.f32 %v1190, %v1433
        %v1435 = vpop.f32.mrf.mxu0
        %v1436 = vadd.f32 %v1190, %v1435
        %1437 = vmatmul.bf16.gmra.mxu0 %v1154
        %v1438 = vpop.f32.mrf.mxu0
        %v1439 = vadd.f32 %v1190, %v1438
        %v1440 = vpop.f32.mrf.mxu0
        %v1441 = vadd.f32 %v1190, %v1440
        %1442 = vdwg.mxu0
        %1443 = vmatpush.bf16.msra.mxu0 %v1320
        %1444 = vmatpush.bf16.msra.mxu0 %v1318
        %1445 = vmatpush.bf16.msra.mxu0 %v1316
        %1446 = vmatpush.bf16.msra.mxu0 %v1314
        %1447 = vmatpush.bf16.msra.mxu0 %v1312
        %1448 = vmatpush.bf16.msra.mxu0 %v1310
        %1449 = vmatpush.bf16.msra.mxu0 %v1308
        %1450 = vmatpush.bf16.msra.mxu0 %v1306
        %1451 = vmatmul.bf16.gmra.mxu0 %v1125
        %v1452 = vpop.f32.mrf.mxu0
        %v1453 = vadd.f32 %v1364, %v1452
        %v1454 = vpop.f32.mrf.mxu0
        %v1455 = vadd.f32 %v1366, %v1454
        %1456 = vmatmul.bf16.gmra.mxu0 %v1127
        %v1457 = vpop.f32.mrf.mxu0
        %v1458 = vadd.f32 %v1369, %v1457
        %v1459 = vpop.f32.mrf.mxu0
        %v1460 = vadd.f32 %v1371, %v1459
        %1461 = vmatmul.bf16.gmra.mxu0 %v1129
        %v1462 = vpop.f32.mrf.mxu0
        %v1463 = vadd.f32 %v1374, %v1462
        %v1464 = vpop.f32.mrf.mxu0
        %v1465 = vadd.f32 %v1376, %v1464
        %1466 = vmatmul.bf16.gmra.mxu0 %v1131
        %v1467 = vpop.f32.mrf.mxu0
        %v1468 = vadd.f32 %v1379, %v1467
        %v1469 = vpop.f32.mrf.mxu0
        %v1470 = vadd.f32 %v1381, %v1469
        %1471 = vmatmul.bf16.gmra.mxu0 %v1133
        %v1472 = vpop.f32.mrf.mxu0
        %v1473 = vadd.f32 %v1384, %v1472
        %v1474 = vpop.f32.mrf.mxu0
        %v1475 = vadd.f32 %v1386, %v1474
        %1476 = vmatmul.bf16.gmra.mxu0 %v1135
        %v1477 = vpop.f32.mrf.mxu0
        %v1478 = vadd.f32 %v1389, %v1477
        %v1479 = vpop.f32.mrf.mxu0
        %v1480 = vadd.f32 %v1391, %v1479
        %1481 = vmatmul.bf16.gmra.mxu0 %v1137
        %v1482 = vpop.f32.mrf.mxu0
        %v1483 = vadd.f32 %v1394, %v1482
        %v1484 = vpop.f32.mrf.mxu0
        %v1485 = vadd.f32 %v1396, %v1484
        %1486 = vmatmul.bf16.gmra.mxu0 %v1139
        %v1487 = vpop.f32.mrf.mxu0
        %v1488 = vadd.f32 %v1399, %v1487
        %v1489 = vpop.f32.mrf.mxu0
        %v1490 = vadd.f32 %v1401, %v1489
        %1491 = vmatmul.bf16.gmra.mxu0 %v1141
        %v1492 = vpop.f32.mrf.mxu0
        %v1493 = vadd.f32 %v1404, %v1492
        %v1494 = vpop.f32.mrf.mxu0
        %v1495 = vadd.f32 %v1406, %v1494
        %1496 = vmatmul.bf16.gmra.mxu0 %v1143
        %v1497 = vpop.f32.mrf.mxu0
        %v1498 = vadd.f32 %v1409, %v1497
        %v1499 = vpop.f32.mrf.mxu0
        %v1500 = vadd.f32 %v1411, %v1499
        %1501 = vmatmul.bf16.gmra.mxu0 %v1145
        %v1502 = vpop.f32.mrf.mxu0
        %v1503 = vadd.f32 %v1414, %v1502
        %v1504 = vpop.f32.mrf.mxu0
        %v1505 = vadd.f32 %v1416, %v1504
        %1506 = vmatmul.bf16.gmra.mxu0 %v1147
        %v1507 = vpop.f32.mrf.mxu0
        %v1508 = vadd.f32 %v1419, %v1507
        %v1509 = vpop.f32.mrf.mxu0
        %v1510 = vadd.f32 %v1421, %v1509
        %1511 = vmatmul.bf16.gmra.mxu0 %v1149
        %v1512 = vpop.f32.mrf.mxu0
        %v1513 = vadd.f32 %v1424, %v1512
        %v1514 = vpop.f32.mrf.mxu0
        %v1515 = vadd.f32 %v1426, %v1514
        %1516 = vmatmul.bf16.gmra.mxu0 %v1151
        %v1517 = vpop.f32.mrf.mxu0
        %v1518 = vadd.f32 %v1429, %v1517
        %v1519 = vpop.f32.mrf.mxu0
        %v1520 = vadd.f32 %v1431, %v1519
        %1521 = vmatmul.bf16.gmra.mxu0 %v1153
        %v1522 = vpop.f32.mrf.mxu0
        %v1523 = vadd.f32 %v1434, %v1522
        %v1524 = vpop.f32.mrf.mxu0
        %v1525 = vadd.f32 %v1436, %v1524
        %1526 = vmatmul.bf16.gmra.mxu0 %v1155
        %v1527 = vpop.f32.mrf.mxu0
        %v1528 = vadd.f32 %v1439, %v1527
        %v1529 = vpop.f32.mrf.mxu0
        %v1530 = vadd.f32 %v1441, %v1529
        %1531 = vdwg.mxu0
        %1532 = vmatpush.bf16.msra.mxu0 %v1305
        %1533 = vmatpush.bf16.msra.mxu0 %v1303
        %1534 = vmatpush.bf16.msra.mxu0 %v1301
        %1535 = vmatpush.bf16.msra.mxu0 %v1299
        %1536 = vmatpush.bf16.msra.mxu0 %v1297
        %1537 = vmatpush.bf16.msra.mxu0 %v1295
        %1538 = vmatpush.bf16.msra.mxu0 %v1293
        %1539 = vmatpush.bf16.msra.mxu0 %v1291
        %1540 = vmatmul.bf16.gmra.mxu0 %v1124
        %v1541 = vpop.f32.mrf.mxu0
        %v1542 = vadd.f32 %v1191, %v1541
        %v1543 = vpop.f32.mrf.mxu0
        %v1544 = vadd.f32 %v1191, %v1543
        %1545 = vmatmul.bf16.gmra.mxu0 %v1126
        %v1546 = vpop.f32.mrf.mxu0
        %v1547 = vadd.f32 %v1191, %v1546
        %v1548 = vpop.f32.mrf.mxu0
        %v1549 = vadd.f32 %v1191, %v1548
        %1550 = vmatmul.bf16.gmra.mxu0 %v1128
        %v1551 = vpop.f32.mrf.mxu0
        %v1552 = vadd.f32 %v1191, %v1551
        %v1553 = vpop.f32.mrf.mxu0
        %v1554 = vadd.f32 %v1191, %v1553
        %1555 = vmatmul.bf16.gmra.mxu0 %v1130
        %v1556 = vpop.f32.mrf.mxu0
        %v1557 = vadd.f32 %v1191, %v1556
        %v1558 = vpop.f32.mrf.mxu0
        %v1559 = vadd.f32 %v1191, %v1558
        %1560 = vmatmul.bf16.gmra.mxu0 %v1132
        %v1561 = vpop.f32.mrf.mxu0
        %v1562 = vadd.f32 %v1191, %v1561
        %v1563 = vpop.f32.mrf.mxu0
        %v1564 = vadd.f32 %v1191, %v1563
        %1565 = vmatmul.bf16.gmra.mxu0 %v1134
        %v1566 = vpop.f32.mrf.mxu0
        %v1567 = vadd.f32 %v1191, %v1566
        %v1568 = vpop.f32.mrf.mxu0
        %v1569 = vadd.f32 %v1191, %v1568
        %1570 = vmatmul.bf16.gmra.mxu0 %v1136
        %v1571 = vpop.f32.mrf.mxu0
        %v1572 = vadd.f32 %v1191, %v1571
        %v1573 = vpop.f32.mrf.mxu0
        %v1574 = vadd.f32 %v1191, %v1573
        %1575 = vmatmul.bf16.gmra.mxu0 %v1138
        %v1576 = vpop.f32.mrf.mxu0
        %v1577 = vadd.f32 %v1191, %v1576
        %v1578 = vpop.f32.mrf.mxu0
        %v1579 = vadd.f32 %v1191, %v1578
        %1580 = vmatmul.bf16.gmra.mxu0 %v1140
        %v1581 = vpop.f32.mrf.mxu0
        %v1582 = vadd.f32 %v1191, %v1581
        %v1583 = vpop.f32.mrf.mxu0
        %v1584 = vadd.f32 %v1191, %v1583
        %1585 = vmatmul.bf16.gmra.mxu0 %v1142
        %v1586 = vpop.f32.mrf.mxu0
        %v1587 = vadd.f32 %v1191, %v1586
        %v1588 = vpop.f32.mrf.mxu0
        %v1589 = vadd.f32 %v1191, %v1588
        %1590 = vmatmul.bf16.gmra.mxu0 %v1144
        %v1591 = vpop.f32.mrf.mxu0
        %v1592 = vadd.f32 %v1191, %v1591
        %v1593 = vpop.f32.mrf.mxu0
        %v1594 = vadd.f32 %v1191, %v1593
        %1595 = vmatmul.bf16.gmra.mxu0 %v1146
        %v1596 = vpop.f32.mrf.mxu0
        %v1597 = vadd.f32 %v1191, %v1596
        %v1598 = vpop.f32.mrf.mxu0
        %v1599 = vadd.f32 %v1191, %v1598
        %1600 = vmatmul.bf16.gmra.mxu0 %v1148
        %v1601 = vpop.f32.mrf.mxu0
        %v1602 = vadd.f32 %v1191, %v1601
        %v1603 = vpop.f32.mrf.mxu0
        %v1604 = vadd.f32 %v1191, %v1603
        %1605 = vmatmul.bf16.gmra.mxu0 %v1150
        %v1606 = vpop.f32.mrf.mxu0
        %v1607 = vadd.f32 %v1191, %v1606
        %v1608 = vpop.f32.mrf.mxu0
        %v1609 = vadd.f32 %v1191, %v1608
        %1610 = vmatmul.bf16.gmra.mxu0 %v1152
        %v1611 = vpop.f32.mrf.mxu0
        %v1612 = vadd.f32 %v1191, %v1611
        %v1613 = vpop.f32.mrf.mxu0
        %v1614 = vadd.f32 %v1191, %v1613
        %1615 = vmatmul.bf16.gmra.mxu0 %v1154
        %v1616 = vpop.f32.mrf.mxu0
        %v1617 = vadd.f32 %v1191, %v1616
        %v1618 = vpop.f32.mrf.mxu0
        %v1619 = vadd.f32 %v1191, %v1618
        %1620 = vdwg.mxu0
        %1621 = vmatpush.bf16.msra.mxu0 %v1321
        %1622 = vmatpush.bf16.msra.mxu0 %v1319
        %1623 = vmatpush.bf16.msra.mxu0 %v1317
        %1624 = vmatpush.bf16.msra.mxu0 %v1315
        %1625 = vmatpush.bf16.msra.mxu0 %v1313
        %1626 = vmatpush.bf16.msra.mxu0 %v1311
        %1627 = vmatpush.bf16.msra.mxu0 %v1309
        %1628 = vmatpush.bf16.msra.mxu0 %v1307
        %1629 = vmatmul.bf16.gmra.mxu0 %v1125
        %v1630 = vpop.f32.mrf.mxu0
        %v1631 = vadd.f32 %v1542, %v1630
        %v1632 = vpop.f32.mrf.mxu0
        %v1633 = vadd.f32 %v1544, %v1632
        %1634 = vmatmul.bf16.gmra.mxu0 %v1127
        %v1635 = vpop.f32.mrf.mxu0
        %v1636 = vadd.f32 %v1547, %v1635
        %v1637 = vpop.f32.mrf.mxu0
        %v1638 = vadd.f32 %v1549, %v1637
        %1639 = vmatmul.bf16.gmra.mxu0 %v1129
        %v1640 = vpop.f32.mrf.mxu0
        %v1641 = vadd.f32 %v1552, %v1640
        %v1642 = vpop.f32.mrf.mxu0
        %v1643 = vadd.f32 %v1554, %v1642
        %1644 = vmatmul.bf16.gmra.mxu0 %v1131
        %v1645 = vpop.f32.mrf.mxu0
        %v1646 = vadd.f32 %v1557, %v1645
        %v1647 = vpop.f32.mrf.mxu0
        %v1648 = vadd.f32 %v1559, %v1647
        %1649 = vmatmul.bf16.gmra.mxu0 %v1133
        %v1650 = vpop.f32.mrf.mxu0
        %v1651 = vadd.f32 %v1562, %v1650
        %v1652 = vpop.f32.mrf.mxu0
        %v1653 = vadd.f32 %v1564, %v1652
        %1654 = vmatmul.bf16.gmra.mxu0 %v1135
        %v1655 = vpop.f32.mrf.mxu0
        %v1656 = vadd.f32 %v1567, %v1655
        %v1657 = vpop.f32.mrf.mxu0
        %v1658 = vadd.f32 %v1569, %v1657
        %1659 = vmatmul.bf16.gmra.mxu0 %v1137
        %v1660 = vpop.f32.mrf.mxu0
        %v1661 = vadd.f32 %v1572, %v1660
        %v1662 = vpop.f32.mrf.mxu0
        %v1663 = vadd.f32 %v1574, %v1662
        %1664 = vmatmul.bf16.gmra.mxu0 %v1139
        %v1665 = vpop.f32.mrf.mxu0
        %v1666 = vadd.f32 %v1577, %v1665
        %v1667 = vpop.f32.mrf.mxu0
        %v1668 = vadd.f32 %v1579, %v1667
        %1669 = vmatmul.bf16.gmra.mxu0 %v1141
        %v1670 = vpop.f32.mrf.mxu0
        %v1671 = vadd.f32 %v1582, %v1670
        %v1672 = vpop.f32.mrf.mxu0
        %v1673 = vadd.f32 %v1584, %v1672
        %1674 = vmatmul.bf16.gmra.mxu0 %v1143
        %v1675 = vpop.f32.mrf.mxu0
        %v1676 = vadd.f32 %v1587, %v1675
        %v1677 = vpop.f32.mrf.mxu0
        %v1678 = vadd.f32 %v1589, %v1677
        %1679 = vmatmul.bf16.gmra.mxu0 %v1145
        %v1680 = vpop.f32.mrf.mxu0
        %v1681 = vadd.f32 %v1592, %v1680
        %v1682 = vpop.f32.mrf.mxu0
        %v1683 = vadd.f32 %v1594, %v1682
        %1684 = vmatmul.bf16.gmra.mxu0 %v1147
        %v1685 = vpop.f32.mrf.mxu0
        %v1686 = vadd.f32 %v1597, %v1685
        %v1687 = vpop.f32.mrf.mxu0
        %v1688 = vadd.f32 %v1599, %v1687
        %1689 = vmatmul.bf16.gmra.mxu0 %v1149
        %v1690 = vpop.f32.mrf.mxu0
        %v1691 = vadd.f32 %v1602, %v1690
        %v1692 = vpop.f32.mrf.mxu0
        %v1693 = vadd.f32 %v1604, %v1692
        %1694 = vmatmul.bf16.gmra.mxu0 %v1151
        %v1695 = vpop.f32.mrf.mxu0
        %v1696 = vadd.f32 %v1607, %v1695
        %v1697 = vpop.f32.mrf.mxu0
        %v1698 = vadd.f32 %v1609, %v1697
        %1699 = vmatmul.bf16.gmra.mxu0 %v1153
        %v1700 = vpop.f32.mrf.mxu0
        %v1701 = vadd.f32 %v1612, %v1700
        %v1702 = vpop.f32.mrf.mxu0
        %v1703 = vadd.f32 %v1614, %v1702
        %1704 = vmatmul.bf16.gmra.mxu0 %v1155
        %v1705 = vpop.f32.mrf.mxu0
        %v1706 = vadd.f32 %v1617, %v1705
        %v1707 = vpop.f32.mrf.mxu0
        %v1708 = vadd.f32 %v1619, %v1707
        %1709 = vdwg.mxu0
        %v1710 = vpack.c.bf16 %v1631, %v1453
        %v1711 = vpack.c.bf16 %v1633, %v1455
        %v1712 = vpack.c.bf16 %v1636, %v1458
        %v1713 = vpack.c.bf16 %v1638, %v1460
        %v1714 = vpack.c.bf16 %v1641, %v1463
        %v1715 = vpack.c.bf16 %v1643, %v1465
        %v1716 = vpack.c.bf16 %v1646, %v1468
        %v1717 = vpack.c.bf16 %v1648, %v1470
        %v1718 = vpack.c.bf16 %v1651, %v1473
        %v1719 = vpack.c.bf16 %v1653, %v1475
        %v1720 = vpack.c.bf16 %v1656, %v1478
        %v1721 = vpack.c.bf16 %v1658, %v1480
        %v1722 = vpack.c.bf16 %v1661, %v1483
        %v1723 = vpack.c.bf16 %v1663, %v1485
        %v1724 = vpack.c.bf16 %v1666, %v1488
        %v1725 = vpack.c.bf16 %v1668, %v1490
        %v1726 = vpack.c.bf16 %v1671, %v1493
        %v1727 = vpack.c.bf16 %v1673, %v1495
        %v1728 = vpack.c.bf16 %v1676, %v1498
        %v1729 = vpack.c.bf16 %v1678, %v1500
        %v1730 = vpack.c.bf16 %v1681, %v1503
        %v1731 = vpack.c.bf16 %v1683, %v1505
        %v1732 = vpack.c.bf16 %v1686, %v1508
        %v1733 = vpack.c.bf16 %v1688, %v1510
        %v1734 = vpack.c.bf16 %v1691, %v1513
        %v1735 = vpack.c.bf16 %v1693, %v1515
        %v1736 = vpack.c.bf16 %v1696, %v1518
        %v1737 = vpack.c.bf16 %v1698, %v1520
        %v1738 = vpack.c.bf16 %v1701, %v1523
        %v1739 = vpack.c.bf16 %v1703, %v1525
        %v1740 = vpack.c.bf16 %v1706, %v1528
        %v1741 = vpack.c.bf16 %v1708, %v1530
        %1742 = vst [vmem:[%s301] sm:$0xff] %v1710
        %1743 = vst [vmem:[%s301 + $0x8] sm:$0xff] %v1711
        %1744 = vst [vmem:[%s301 + $0x10] sm:$0xff] %v1712
        %1745 = vst [vmem:[%s301 + $0x18] sm:$0xff] %v1713
        %1746 = vst [vmem:[%s301 + $0x20] sm:$0xff] %v1714
        %1747 = vst [vmem:[%s301 + $0x28] sm:$0xff] %v1715
        %1748 = vst [vmem:[%s301 + $0x30] sm:$0xff] %v1716
        %1749 = vst [vmem:[%s301 + $0x38] sm:$0xff] %v1717
        %1750 = vst [vmem:[%s301 + $0x40] sm:$0xff] %v1718
        %1751 = vst [vmem:[%s301 + $0x48] sm:$0xff] %v1719
        %1752 = vst [vmem:[%s301 + $0x50] sm:$0xff] %v1720
        %1753 = vst [vmem:[%s301 + $0x58] sm:$0xff] %v1721
        %1754 = vst [vmem:[%s301 + $0x60] sm:$0xff] %v1722
        %1755 = vst [vmem:[%s301 + $0x68] sm:$0xff] %v1723
        %1756 = vst [vmem:[%s301 + $0x70] sm:$0xff] %v1724
        %1757 = vst [vmem:[%s301 + $0x78] sm:$0xff] %v1725
        %1758 = vst [vmem:[%s301 + $0x80] sm:$0xff] %v1726
        %1759 = vst [vmem:[%s301 + $0x88] sm:$0xff] %v1727
        %1760 = vst [vmem:[%s301 + $0x90] sm:$0xff] %v1728
        %1761 = vst [vmem:[%s301 + $0x98] sm:$0xff] %v1729
        %1762 = vst [vmem:[%s301 + $0xa0] sm:$0xff] %v1730
        %1763 = vst [vmem:[%s301 + $0xa8] sm:$0xff] %v1731
        %1764 = vst [vmem:[%s301 + $0xb0] sm:$0xff] %v1732
        %1765 = vst [vmem:[%s301 + $0xb8] sm:$0xff] %v1733
        %1766 = vst [vmem:[%s301 + $0xc0] sm:$0xff] %v1734
        %1767 = vst [vmem:[%s301 + $0xc8] sm:$0xff] %v1735
        %1768 = vst [vmem:[%s301 + $0xd0] sm:$0xff] %v1736
        %1769 = vst [vmem:[%s301 + $0xd8] sm:$0xff] %v1737
        %1770 = vst [vmem:[%s301 + $0xe0] sm:$0xff] %v1738
        %1771 = vst [vmem:[%s301 + $0xe8] sm:$0xff] %v1739
        %1772 = vst [vmem:[%s301 + $0xf0] sm:$0xff] %v1740
        %1773 = vst [vmem:[%s301 + $0xf8] sm:$0xff] %v1741
        %s1774 = sand.u32 %s142, 1
        %s1775 = scalar_lea.sflag [#allocation4], %s1774
        %s1776 = sand.u32 %s142, 1
        %s1777 = smul.addr %s1776, 256
        %s1778 = scalar_lea.vmem [#allocation10], %s1777
        // Predicated region
        $region57: #{tpu_custom_call.1} parent=39 // pred_check
          %p1779 = pneg %p152
        $region58: #{tpu_custom_call.1} parent=39 // pred_check_branch
          %1781 = sbr.rel (%p1779) target = $region60
        $region59: #{tpu_custom_call.1} parent=39 // pred_region
          %s1782 = smul.u32 32, %s24
          %s1783 = ssub.s32 125, %s1782
          %p1784 = scmp.lt.s32.totalorder %s1783, 32
          %s1785 = scalar_select %p1784, %s1783, 32
          %s1786 = smul.u32 4, %s1785
          %s1787 = smul.u32 %s1786, 2
          %s1788 = ssub.s32 256, %s1787
          %s1789 = sshll.u32 %s1788, 4
          %1790 = vsyncadd %s1775, %s1789
          %p1791 = scmp.ne.s32.totalorder 0, %s1787
          %s1792 = smul.addr %s1782, 2
          %s1793 = smul.addr %s1792, 4
          %s1794 = scalar_lea.hbm %s5, %s1793
          %s1795 = smul.u32 8, %s1785
          %s1796 = sshll.u32 %s1778, 4
          %s1797 = int_to_ptr.vmem [resolvable:$true] %s1796
          %s1798 = sshll.u32 %s1794, 4
          %s1799 = int_to_ptr.hbm [resolvable:$true] %s1798
          %s1800 = sshll.u32 %s1795, 4
          %1804 = dma.vmem_to_hbm [thread:$0]  (%p1791), %s1797, %s1800, %s1799, %s1775, 128, 128, 8
        $region60: #{tpu_custom_call.1} parent=39 // pred_fallthru
          _
      $region40: #{tpu_custom_call.1} parent=5 // pred_fallthru
        _
      %p1805 = scmp.le.s32.totalorder 2, %s19
      // Predicated region
      $region61: #{tpu_custom_call.1} parent=5 // pred_check
        %p1806 = pneg %p1805
      $region62: #{tpu_custom_call.1} parent=5 // pred_check_branch
        %1808 = sbr.rel (%p1806) target = $region64
      $region63: #{tpu_custom_call.1} parent=5 // pred_region
        %s1809 = ssub.s32 %s19, 2
        // Predicated region
        $region65: #{tpu_custom_call.1} parent=63 // pred_check
          %p1810 = pneg %p158
        $region66: #{tpu_custom_call.1} parent=63 // pred_check_branch
          %1812 = sbr.rel (%p1810) target = $region68
        $region67: #{tpu_custom_call.1} parent=63 // pred_region
          %s1813 = sand.u32 %s143, 1
          %s1814 = scalar_lea.sflag [#allocation4], %s1813
          %s1815 = sand.u32 %s143, 1
          %s1816 = smul.addr %s1815, 256
          %s1817 = scalar_lea.vmem [#allocation10], %s1816
          %1819 = dma.done %s1814, 4096
        $region68: #{tpu_custom_call.1} parent=63 // pred_fallthru
          _
      $region64: #{tpu_custom_call.1} parent=5 // pred_fallthru
        _
    $region6: #{tpu_custom_call.1} parent=1 // loop_footer
      %s23 = sadd.s32 1, %s19
    $region7: #{tpu_custom_call.1} parent=1 // loop_footer_branch
      %18 = sbr.rel target = $region3
    $region8: #{tpu_custom_call.1} parent=1 // loop_exit
      _
    %1820 = vsyncpa [#allocation3], 1
    %s1821 = scalar_lea.sflag [#allocation3], 1
    %1822 = vsyncpa %s1821, 1
    %1823 = vsyncpa [#allocation6], 1
    %1824 = vsyncpa [#allocation9], 1
    %1825 = vsyncpa [#allocation4], 1
    %s1826 = scalar_lea.sflag [#allocation4], 1
    %1827 = vsyncpa %s1826, 1

</llo_original>
